<compile_context>
chip_gen: v7x
topology: tpu7x:2x2x1
jax: 0.10.0
libtpu: 0.0.40
codegen_flags: <defaults>
</compile_context>

<pallas_src>
import jax
import jax.numpy as jnp
import numpy as np
from jax.experimental import pallas as pl
from jax.experimental.pallas import tpu as pltpu

# ----------------------------- hparams (small, synthetic) --------------------
EXT_INPUT_DIM = 4
CO_DIM = 8
GEN_DIM = 32
FAC_DIM = 16
CI_ENC_DIM = 8
CON_DIM = 16
CELL_CLIP = 5.0

BATCH = 8          # fill the 8-sublane f32 vreg
SEQ_LEN = 16       # time steps fused into one pallas_call

H0_DIM = GEN_DIM + CON_DIM + CO_DIM + CO_DIM + (CO_DIM + EXT_INPUT_DIM) + FAC_DIM  # 92
GATE_PAD = 128     # lane stride for gate slots in packed weights


# ----------------------------- Pallas kernel ---------------------------------
def lfads_decoder_kernel(ci_ref, ext_ref, eps_ref,
                         gen0_ref, con0_ref, fac0_ref,
                         w1c_ref, b1c_ref, w2c_ref,
                         wco_ref, bco_ref,
                         w1g_ref, b1g_ref, w2g_ref,
                         wfac_ref,
                         gen_out_ref, con_out_ref, mean_out_ref, std_out_ref,
                         geninp_out_ref, fac_out_ref,
                         gen_s, con_s, fac_s):
    P = GATE_PAD
    t = pl.program_id(0)

    # Initialize the carried state from h_0 on the first step only.
    @pl.when(t == 0)
    def _():
        gen_s[...] = gen0_ref[...]
        con_s[...] = con0_ref[...]
        fac_s[...] = fac0_ref[...]

    ci = ci_ref[0]          # (B, 2*ci_enc_dim)
    ext = ext_ref[0]        # (B, ext_input_dim)
    eps = eps_ref[0]        # (B, co_dim)

    gen_h = gen_s[...]
    con_h = con_s[...]
    factor = fac_s[...]

    # ---- controller ClippedGRUCell (dropout = identity in eval mode) --------
    # merged [x, h] matmul; gate slots at lane offsets 0 / 128 / 256
    xh = jnp.concatenate([ci, factor, con_h], axis=1)           # (B, 2*ci+fac+con)
    pre = jnp.dot(xh, w1c_ref[...],
                  preferred_element_type=jnp.float32) + b1c_ref[...]
    z = jax.nn.sigmoid(pre[:, 0:CON_DIM])
    r = jax.nn.sigmoid(pre[:, P:P + CON_DIM])
    # NOTE: reference computes (r * hidden) @ W_hn.T (operator precedence) --
    # keep it that way; do NOT "fix" to r * (h @ W_hn.T).
    cand = jnp.dot(r * con_h, w2c_ref[...], preferred_element_type=jnp.float32)
    n = jnp.tanh(pre[:, 2 * P:2 * P + CON_DIM] + cand)
    con_h = jnp.clip(z * con_h + (1.0 - z) * n, -CELL_CLIP, CELL_CLIP)

    # ---- controller output -> reparameterized posterior sample --------------
    cop = jnp.dot(con_h, wco_ref[...],
                  preferred_element_type=jnp.float32) + bco_ref[...]
    co_mean = cop[:, 0:CO_DIM]
    co_std = jnp.exp(0.5 * cop[:, P:P + CO_DIM])   # sqrt(exp(logvar))
    con_output = co_mean + co_std * eps
    gen_input = jnp.concatenate([con_output, ext], axis=1)

    # ---- generator ClippedGRUCell -------------------------------------------
    xh = jnp.concatenate([gen_input, gen_h], axis=1)
    pre = jnp.dot(xh, w1g_ref[...],
                  preferred_element_type=jnp.float32) + b1g_ref[...]
    z = jax.nn.sigmoid(pre[:, 0:GEN_DIM])
    r = jax.nn.sigmoid(pre[:, P:P + GEN_DIM])
    cand = jnp.dot(r * gen_h, w2g_ref[...], preferred_element_type=jnp.float32)
    n = jnp.tanh(pre[:, 2 * P:2 * P + GEN_DIM] + cand)
    gen_h = jnp.clip(z * gen_h + (1.0 - z) * n, -CELL_CLIP, CELL_CLIP)

    # ---- kernel-normalized factor readout (weight pre-normalized host-side) -
    factor = jnp.dot(gen_h, wfac_ref[...], preferred_element_type=jnp.float32)

    # carry state to the next grid step
    gen_s[...] = gen_h
    con_s[...] = con_h
    fac_s[...] = factor

    # per-step outputs (hidden concatenation happens outside the kernel)
    gen_out_ref[0] = gen_h
    con_out_ref[0] = con_h
    mean_out_ref[0] = co_mean
    std_out_ref[0] = co_std
    geninp_out_ref[0] = gen_input
    fac_out_ref[0] = factor


# ----------------------------- host-side weight packing ----------------------
def _pack_gru(w_ih, b_ih, w_hh, b_hh, hidden):
    """Pack a ClippedGRUCell into (W1, b1, W2).

    W1: ((in+H), 3*GATE_PAD) acting on concat([x, h]); gate g lives at lane
        offset g*GATE_PAD.  The n-gate columns only carry the x-side weight
        (the h-side candidate weight W2 is applied to (r*h) separately).
    b1: (1, 3*GATE_PAD) = b_ih + b_hh per gate (b_hh_n folded in too).
    W2: (H, H) = W_hn.T (candidate hidden weight, transposed).
    """
    w_ih = np.asarray(w_ih, np.float32)
    w_hh = np.asarray(w_hh, np.float32)
    b_ih = np.asarray(b_ih, np.float32).reshape(-1)
    b_hh = np.asarray(b_hh, np.float32).reshape(-1)
    in_dim = w_ih.shape[1]
    H, P = hidden, GATE_PAD
    w1 = np.zeros((in_dim + H, 3 * P), np.float32)
    b1 = np.zeros((1, 3 * P), np.float32)
    for g in range(3):
        cols = slice(g * P, g * P + H)
        rows = slice(g * H, (g + 1) * H)
        w1[:in_dim, cols] = w_ih[rows].T
        if g < 2:
            w1[in_dim:, cols] = w_hh[rows].T
        b1[0, cols] = b_ih[rows] + b_hh[rows]
    w2 = np.ascontiguousarray(w_hh[2 * H:].T)
    return jnp.asarray(w1), jnp.asarray(b1), jnp.asarray(w2)


def pack_decoder_params(p):
    w1c, b1c, w2c = _pack_gru(p["w_ih_con"], p["b_ih_con"],
                              p["w_hh_con"], p["b_hh_con"], CON_DIM)
    w1g, b1g, w2g = _pack_gru(p["w_ih_gen"], p["b_ih_gen"],
                              p["w_hh_gen"], p["b_hh_gen"], GEN_DIM)

    # co_linear: mean at lane 0, logvar at lane GATE_PAD
    w_co = np.asarray(p["w_co"], np.float32)
    b_co = np.asarray(p["b_co"], np.float32).reshape(-1)
    wco = np.zeros((CON_DIM, 2 * GATE_PAD), np.float32)
    bco = np.zeros((1, 2 * GATE_PAD), np.float32)
    wco[:, :CO_DIM] = w_co[:CO_DIM].T
    wco[:, GATE_PAD:GATE_PAD + CO_DIM] = w_co[CO_DIM:].T
    bco[0, :CO_DIM] = b_co[:CO_DIM]
    bco[0, GATE_PAD:GATE_PAD + CO_DIM] = b_co[CO_DIM:]

    # KernelNormalizedLinear: pre-normalize rows (F.normalize eps=1e-12), transpose
    w_fac = np.asarray(p["w_fac"], np.float32)
    norm = np.maximum(np.sqrt((w_fac * w_fac).sum(axis=1, keepdims=True)), 1e-12)
    wfac = np.ascontiguousarray((w_fac / norm).T)       # (gen_dim, fac_dim)

    return {"w1c": w1c, "b1c": b1c, "w2c": w2c,
            "wco": jnp.asarray(wco), "bco": jnp.asarray(bco),
            "w1g": w1g, "b1g": b1g, "w2g": w2g,
            "wfac": jnp.asarray(wfac)}


# ----------------------------- wrapper ----------------------------------------
def decoder_rollout(ci_seq, ext_seq, eps_seq, h0, pp):
    """Run T fused DecoderCell steps; returns (T, B, H0_DIM) hidden per step."""
    T, B, _ = ci_seq.shape
    gen0 = h0[:, :GEN_DIM]
    con0 = h0[:, GEN_DIM:GEN_DIM + CON_DIM]
    fac0 = h0[:, H0_DIM - FAC_DIM:]

    def seq_spec(d):
        return pl.BlockSpec((1, B, d), lambda t: (t, 0, 0))

    def res_spec(x):
        nd = x.ndim
        return pl.BlockSpec(x.shape, lambda t: (0,) * nd)

    weights = (pp["w1c"], pp["b1c"], pp["w2c"], pp["wco"], pp["bco"],
               pp["w1g"], pp["b1g"], pp["w2g"], pp["wfac"])
    out_dims = (GEN_DIM, CON_DIM, CO_DIM, CO_DIM, CO_DIM + EXT_INPUT_DIM, FAC_DIM)

    outs = pl.pallas_call(
        lfads_decoder_kernel,
        grid=(T,),
        in_specs=[seq_spec(2 * CI_ENC_DIM), seq_spec(EXT_INPUT_DIM), seq_spec(CO_DIM),
                  res_spec(gen0), res_spec(con0), res_spec(fac0)]
                 + [res_spec(w) for w in weights],
        out_specs=tuple(seq_spec(d) for d in out_dims),
        out_shape=tuple(jax.ShapeDtypeStruct((T, B, d), jnp.float32) for d in out_dims),
        scratch_shapes=[pltpu.VMEM((B, GEN_DIM), jnp.float32),
                        pltpu.VMEM((B, CON_DIM), jnp.float32),
                        pltpu.VMEM((B, FAC_DIM), jnp.float32)],
        compiler_params=pltpu.CompilerParams(dimension_semantics=("arbitrary",)),
    )(ci_seq, ext_seq, eps_seq, gen0, con0, fac0, *weights)

    # hidden = cat([gen_state, con_state, co_mean, co_std, gen_input, factor])
    return jnp.concatenate(outs, axis=-1)


# ----------------------------- pure-JAX reference ------------------------------
def _clipped_gru_ref(x, h, w_ih, b_ih, w_hh, b_hh, H):
    x_all = x @ w_ih.T + b_ih
    x_z, x_r, x_n = x_all[:, :H], x_all[:, H:2 * H], x_all[:, 2 * H:]
    h_all = h @ w_hh[:2 * H].T + b_hh[:2 * H]
    h_z, h_r = h_all[:, :H], h_all[:, H:]
    z = jax.nn.sigmoid(x_z + h_z)
    r = jax.nn.sigmoid(x_r + h_r)
    h_n = (r * h) @ w_hh[2 * H:].T + b_hh[2 * H:]
    n = jnp.tanh(x_n + h_n)
    return jnp.clip(z * h + (1.0 - z) * n, -CELL_CLIP, CELL_CLIP)


def decoder_cell_reference(inp, h0, eps, p):
    gen_state = h0[:, :GEN_DIM]
    con_state = h0[:, GEN_DIM:GEN_DIM + CON_DIM]
    factor = h0[:, H0_DIM - FAC_DIM:]
    ci_step = inp[:, :2 * CI_ENC_DIM]
    ext_step = inp[:, 2 * CI_ENC_DIM:]

    con_input = jnp.concatenate([ci_step, factor], axis=1)
    con_state = _clipped_gru_ref(con_input, con_state, p["w_ih_con"], p["b_ih_con"],
                                 p["w_hh_con"], p["b_hh_con"], CON_DIM)
    co_params = con_state @ p["w_co"].T + p["b_co"]
    co_mean, co_logvar = co_params[:, :CO_DIM], co_params[:, CO_DIM:]
    co_std = jnp.exp(0.5 * co_logvar)
    con_output = co_mean + co_std * eps
    gen_input = jnp.concatenate([con_output, ext_step], axis=1)
    gen_state = _clipped_gru_ref(gen_input, gen_state, p["w_ih_gen"], p["b_ih_gen"],
                                 p["w_hh_gen"], p["b_hh_gen"], GEN_DIM)
    w = p["w_fac"]
    w_n = w / jnp.maximum(jnp.linalg.norm(w, axis=1, keepdims=True), 1e-12)
    factor = gen_state @ w_n.T
    return jnp.concatenate(
        [gen_state, con_state, co_mean, co_std, gen_input, factor], axis=1)


def reference_rollout(ci_seq, ext_seq, eps_seq, h0, params):
    h = h0
    outs = []
    for t in range(ci_seq.shape[0]):
        inp = jnp.concatenate([ci_seq[t], ext_seq[t]], axis=1)
        h = decoder_cell_reference(inp, h, eps_seq[t], params)
        outs.append(h)
    return jnp.stack(outs, axis=0)


# ----------------------------- deterministic params ----------------------------
def init_params(key):
    ks = jax.random.split(key, 11)
    con_in = 2 * CI_ENC_DIM + FAC_DIM
    gen_in = EXT_INPUT_DIM + CO_DIM

    def u(k, shape, fan):
        s = 1.0 / np.sqrt(fan)
        return jax.random.uniform(k, shape, jnp.float32, -s, s)

    return {
        "w_ih_con": u(ks[0], (3 * CON_DIM, con_in), CON_DIM),
        "b_ih_con": u(ks[1], (3 * CON_DIM,), CON_DIM),
        "w_hh_con": u(ks[2], (3 * CON_DIM, CON_DIM), CON_DIM),
        "b_hh_con": u(ks[3], (3 * CON_DIM,), CON_DIM),
        "w_co":     u(ks[4], (2 * CO_DIM, CON_DIM), CON_DIM),
        "b_co":     u(ks[5], (2 * CO_DIM,), CON_DIM),
        "w_ih_gen": u(ks[6], (3 * GEN_DIM, gen_in), GEN_DIM),
        "b_ih_gen": u(ks[7], (3 * GEN_DIM,), GEN_DIM),
        "w_hh_gen": u(ks[8], (3 * GEN_DIM, GEN_DIM), GEN_DIM),
        "b_hh_gen": u(ks[9], (3 * GEN_DIM,), GEN_DIM),
        "w_fac":    u(ks[10], (FAC_DIM, GEN_DIM), GEN_DIM),
    }


# ----------------------------- main ---------------------------------------------
if __name__ == "__main__":
    key = jax.random.PRNGKey(0)
    k_ci, k_ext, k_eps, k_h0, k_par = jax.random.split(key, 5)

    T, B = SEQ_LEN, BATCH
    ci_seq = jax.random.normal(k_ci, (T, B, 2 * CI_ENC_DIM), jnp.float32)
    ext_seq = jax.random.normal(k_ext, (T, B, EXT_INPUT_DIM), jnp.float32)
    eps_seq = jax.random.normal(k_eps, (T, B, CO_DIM), jnp.float32)
    h0 = jax.random.normal(k_h0, (B, H0_DIM), jnp.float32)
    params = init_params(k_par)

    packed = pack_decoder_params(params)   # host-side: transpose / merge / normalize

    out = jax.jit(decoder_rollout)(ci_seq, ext_seq, eps_seq, h0, packed)
    out = jax.block_until_ready(out)

    ref = reference_rollout(ci_seq, ext_seq, eps_seq, h0, params)
    np.testing.assert_allclose(np.asarray(out), np.asarray(ref),
                               rtol=1e-4, atol=1e-4)
    assert out.shape == (T, B, H0_DIM)
    print("KERNEL_OK")
</pallas_src>

<mosaic_0001>
module attributes {stable_mosaic.version = 11 : i64} {
  func.func @lfads_decoder_kernel(%arg0: i32, %arg1: memref<1x8x16xf32, #tpu.memory_space<vmem>>, %arg2: memref<1x8x4xf32, #tpu.memory_space<vmem>>, %arg3: memref<1x8x8xf32, #tpu.memory_space<vmem>>, %arg4: memref<8x32xf32, #tpu.memory_space<vmem>>, %arg5: memref<8x16xf32, #tpu.memory_space<vmem>>, %arg6: memref<8x16xf32, #tpu.memory_space<vmem>>, %arg7: memref<48x384xf32, #tpu.memory_space<vmem>>, %arg8: memref<1x384xf32, #tpu.memory_space<vmem>>, %arg9: memref<16x16xf32, #tpu.memory_space<vmem>>, %arg10: memref<16x256xf32, #tpu.memory_space<vmem>>, %arg11: memref<1x256xf32, #tpu.memory_space<vmem>>, %arg12: memref<44x384xf32, #tpu.memory_space<vmem>>, %arg13: memref<1x384xf32, #tpu.memory_space<vmem>>, %arg14: memref<32x32xf32, #tpu.memory_space<vmem>>, %arg15: memref<32x16xf32, #tpu.memory_space<vmem>>, %arg16: memref<1x8x32xf32, #tpu.memory_space<vmem>>, %arg17: memref<1x8x16xf32, #tpu.memory_space<vmem>>, %arg18: memref<1x8x8xf32, #tpu.memory_space<vmem>>, %arg19: memref<1x8x8xf32, #tpu.memory_space<vmem>>, %arg20: memref<1x8x12xf32, #tpu.memory_space<vmem>>, %arg21: memref<1x8x16xf32, #tpu.memory_space<vmem>>, %arg22: memref<8x32xf32, #tpu.memory_space<vmem>>, %arg23: memref<8x16xf32, #tpu.memory_space<vmem>>, %arg24: memref<8x16xf32, #tpu.memory_space<vmem>>) attributes {dimension_semantics = [#tpu.dimension_semantics<arbitrary>], iteration_bounds = array<i64: 16>, scalar_prefetch = 0 : i64, scratch_operands = 3 : i64, tpu.core_type = #tpu.core_type<tc>, window_params = [{transform_indices = @transform_0, window_bounds = array<i64: 1, 8, 16>}, {transform_indices = @transform_1, window_bounds = array<i64: 1, 8, 4>}, {transform_indices = @transform_2, window_bounds = array<i64: 1, 8, 8>}, {pipeline_mode = #tpu.pipeline_mode<synchronous>, transform_indices = @transform_3, window_bounds = array<i64: 8, 32>}, {pipeline_mode = #tpu.pipeline_mode<synchronous>, transform_indices = @transform_4, window_bounds = array<i64: 8, 16>}, {pipeline_mode = #tpu.pipeline_mode<synchronous>, transform_indices = @transform_5, window_bounds = array<i64: 8, 16>}, {pipeline_mode = #tpu.pipeline_mode<synchronous>, transform_indices = @transform_6, window_bounds = array<i64: 48, 384>}, {pipeline_mode = #tpu.pipeline_mode<synchronous>, transform_indices = @transform_7, window_bounds = array<i64: 1, 384>}, {pipeline_mode = #tpu.pipeline_mode<synchronous>, transform_indices = @transform_8, window_bounds = array<i64: 16, 16>}, {pipeline_mode = #tpu.pipeline_mode<synchronous>, transform_indices = @transform_9, window_bounds = array<i64: 16, 256>}, {pipeline_mode = #tpu.pipeline_mode<synchronous>, transform_indices = @transform_10, window_bounds = array<i64: 1, 256>}, {pipeline_mode = #tpu.pipeline_mode<synchronous>, transform_indices = @transform_11, window_bounds = array<i64: 44, 384>}, {pipeline_mode = #tpu.pipeline_mode<synchronous>, transform_indices = @transform_12, window_bounds = array<i64: 1, 384>}, {pipeline_mode = #tpu.pipeline_mode<synchronous>, transform_indices = @transform_13, window_bounds = array<i64: 32, 32>}, {pipeline_mode = #tpu.pipeline_mode<synchronous>, transform_indices = @transform_14, window_bounds = array<i64: 32, 16>}, {transform_indices = @transform_15, window_bounds = array<i64: 1, 8, 32>}, {transform_indices = @transform_16, window_bounds = array<i64: 1, 8, 16>}, {transform_indices = @transform_17, window_bounds = array<i64: 1, 8, 8>}, {transform_indices = @transform_18, window_bounds = array<i64: 1, 8, 8>}, {transform_indices = @transform_19, window_bounds = array<i64: 1, 8, 12>}, {transform_indices = @transform_20, window_bounds = array<i64: 1, 8, 16>}]} {
    %c0_i32 = arith.constant 0 : i32
    %0 = arith.cmpi eq, %arg0, %c0_i32 : i32
    %1 = arith.extui %0 : i1 to i32
    %c0_i32_0 = arith.constant 0 : i32
    %2 = arith.cmpi ne, %1, %c0_i32_0 : i32
    scf.if %2 {
      %c0_73 = arith.constant 0 : index
      %c0_74 = arith.constant 0 : index
      %114 = vector.load %arg4[%c0_73, %c0_74] : memref<8x32xf32, #tpu.memory_space<vmem>>, vector<8x32xf32>
      %c0_75 = arith.constant 0 : index
      %c0_76 = arith.constant 0 : index
      %115 = vector.load %arg22[%c0_75, %c0_76] : memref<8x32xf32, #tpu.memory_space<vmem>>, vector<8x32xf32>
      tpu.vector_store %arg22[%c0_75, %c0_76], %114 {strides = array<i32>} : memref<8x32xf32, #tpu.memory_space<vmem>>, vector<8x32xf32>,
      %c0_77 = arith.constant 0 : index
      %c0_78 = arith.constant 0 : index
      %116 = vector.load %arg5[%c0_77, %c0_78] : memref<8x16xf32, #tpu.memory_space<vmem>>, vector<8x16xf32>
      %c0_79 = arith.constant 0 : index
      %c0_80 = arith.constant 0 : index
      %117 = vector.load %arg23[%c0_79, %c0_80] : memref<8x16xf32, #tpu.memory_space<vmem>>, vector<8x16xf32>
      tpu.vector_store %arg23[%c0_79, %c0_80], %116 {strides = array<i32>} : memref<8x16xf32, #tpu.memory_space<vmem>>, vector<8x16xf32>,
      %c0_81 = arith.constant 0 : index
      %c0_82 = arith.constant 0 : index
      %118 = vector.load %arg6[%c0_81, %c0_82] : memref<8x16xf32, #tpu.memory_space<vmem>>, vector<8x16xf32>
      %c0_83 = arith.constant 0 : index
      %c0_84 = arith.constant 0 : index
      %119 = vector.load %arg24[%c0_83, %c0_84] : memref<8x16xf32, #tpu.memory_space<vmem>>, vector<8x16xf32>
      tpu.vector_store %arg24[%c0_83, %c0_84], %118 {strides = array<i32>} : memref<8x16xf32, #tpu.memory_space<vmem>>, vector<8x16xf32>,
    } else {
    }
    %c0 = arith.constant 0 : index
    %c0_1 = arith.constant 0 : index
    %c0_2 = arith.constant 0 : index
    %3 = vector.load %arg1[%c0, %c0_1, %c0_2] : memref<1x8x16xf32, #tpu.memory_space<vmem>>, vector<1x8x16xf32>
    %4 = vector.shape_cast %3 : vector<1x8x16xf32> to vector<8x16xf32>
    %c0_3 = arith.constant 0 : index
    %c0_4 = arith.constant 0 : index
    %c0_5 = arith.constant 0 : index
    %5 = vector.load %arg2[%c0_3, %c0_4, %c0_5] : memref<1x8x4xf32, #tpu.memory_space<vmem>>, vector<1x8x4xf32>
    %6 = vector.shape_cast %5 : vector<1x8x4xf32> to vector<8x4xf32>
    %c0_6 = arith.constant 0 : index
    %c0_7 = arith.constant 0 : index
    %c0_8 = arith.constant 0 : index
    %7 = vector.load %arg3[%c0_6, %c0_7, %c0_8] : memref<1x8x8xf32, #tpu.memory_space<vmem>>, vector<1x8x8xf32>
    %8 = vector.shape_cast %7 : vector<1x8x8xf32> to vector<8x8xf32>
    %c0_9 = arith.constant 0 : index
    %c0_10 = arith.constant 0 : index
    %9 = vector.load %arg22[%c0_9, %c0_10] : memref<8x32xf32, #tpu.memory_space<vmem>>, vector<8x32xf32>
    %c0_11 = arith.constant 0 : index
    %c0_12 = arith.constant 0 : index
    %10 = vector.load %arg23[%c0_11, %c0_12] : memref<8x16xf32, #tpu.memory_space<vmem>>, vector<8x16xf32>
    %c0_13 = arith.constant 0 : index
    %c0_14 = arith.constant 0 : index
    %11 = vector.load %arg24[%c0_13, %c0_14] : memref<8x16xf32, #tpu.memory_space<vmem>>, vector<8x16xf32>
    %12 = tpu.concatenate %4, %11, %10 in 1 : vector<8x16xf32>, vector<8x16xf32>, vector<8x16xf32> -> vector<8x48xf32>
    %c0_15 = arith.constant 0 : index
    %c0_16 = arith.constant 0 : index
    %13 = vector.load %arg7[%c0_15, %c0_16] : memref<48x384xf32, #tpu.memory_space<vmem>>, vector<48x384xf32>
    %cst = arith.constant dense<0.000000e+00> : vector<8x384xf32>
    %14 = tpu.matmul %12, %13, %cst {dimension_numbers = #tpu.dot_dimension_numbers<[1], [0], [0], [1], [0, 0, 1, 1], [], []>} : vector<8x48xf32>, vector<48x384xf32>, vector<8x384xf32> -> vector<8x384xf32>
    %c0_17 = arith.constant 0 : index
    %c0_18 = arith.constant 0 : index
    %15 = vector.load %arg8[%c0_17, %c0_18] : memref<1x384xf32, #tpu.memory_space<vmem>>, vector<1x384xf32>
    %16 = vector.broadcast %15 : vector<1x384xf32> to vector<8x384xf32>
    %17 = arith.addf %14, %16 : vector<8x384xf32>
    %18 = vector.extract_strided_slice %17 {offsets = [0, 0], sizes = [8, 16], strides = [1, 1]} : vector<8x384xf32> to vector<8x16xf32>
    %19 = arith.negf %18 : vector<8x16xf32>
    %20 = math.exp %19 : vector<8x16xf32>
    %cst_19 = arith.constant 1.000000e+00 : f32
    %21 = vector.broadcast %cst_19 : f32 to vector<8x16xf32>
    %22 = arith.addf %21, %20 : vector<8x16xf32>
    %23 = arith.divf %21, %22 : vector<8x16xf32>
    %24 = vector.extract_strided_slice %17 {offsets = [0, 128], sizes = [8, 16], strides = [1, 1]} : vector<8x384xf32> to vector<8x16xf32>
    %25 = arith.negf %24 : vector<8x16xf32>
    %26 = math.exp %25 : vector<8x16xf32>
    %cst_20 = arith.constant 1.000000e+00 : f32
    %27 = vector.broadcast %cst_20 : f32 to vector<8x16xf32>
    %28 = arith.addf %27, %26 : vector<8x16xf32>
    %29 = arith.divf %27, %28 : vector<8x16xf32>
    %30 = arith.mulf %29, %10 : vector<8x16xf32>
    %c0_21 = arith.constant 0 : index
    %c0_22 = arith.constant 0 : index
    %31 = vector.load %arg9[%c0_21, %c0_22] : memref<16x16xf32, #tpu.memory_space<vmem>>, vector<16x16xf32>
    %cst_23 = arith.constant dense<0.000000e+00> : vector<8x16xf32>
    %32 = tpu.matmul %30, %31, %cst_23 {dimension_numbers = #tpu.dot_dimension_numbers<[1], [0], [0], [1], [0, 0, 1, 1], [], []>} : vector<8x16xf32>, vector<16x16xf32>, vector<8x16xf32> -> vector<8x16xf32>
    %33 = vector.extract_strided_slice %17 {offsets = [0, 256], sizes = [8, 16], strides = [1, 1]} : vector<8x384xf32> to vector<8x16xf32>
    %34 = arith.addf %33, %32 : vector<8x16xf32>
    %35 = math.tanh %34 : vector<8x16xf32>
    %36 = arith.mulf %23, %10 : vector<8x16xf32>
    %cst_24 = arith.constant 1.000000e+00 : f32
    %37 = vector.broadcast %cst_24 : f32 to vector<8x16xf32>
    %38 = arith.subf %37, %23 : vector<8x16xf32>
    %39 = arith.mulf %38, %35 : vector<8x16xf32>
    %40 = arith.addf %36, %39 : vector<8x16xf32>
    %cst_25 = arith.constant -5.000000e+00 : f32
    %cst_26 = arith.constant 5.000000e+00 : f32
    %41 = vector.broadcast %cst_25 : f32 to vector<8x16xf32>
    %42 = arith.maximumf %41, %40 : vector<8x16xf32>
    %43 = vector.broadcast %cst_26 : f32 to vector<8x16xf32>
    %44 = arith.minimumf %43, %42 : vector<8x16xf32>
    %c0_27 = arith.constant 0 : index
    %c0_28 = arith.constant 0 : index
    %45 = vector.load %arg10[%c0_27, %c0_28] : memref<16x256xf32, #tpu.memory_space<vmem>>, vector<16x256xf32>
    %cst_29 = arith.constant dense<0.000000e+00> : vector<8x256xf32>
    %46 = tpu.matmul %44, %45, %cst_29 {dimension_numbers = #tpu.dot_dimension_numbers<[1], [0], [0], [1], [0, 0, 1, 1], [], []>} : vector<8x16xf32>, vector<16x256xf32>, vector<8x256xf32> -> vector<8x256xf32>
    %c0_30 = arith.constant 0 : index
    %c0_31 = arith.constant 0 : index
    %47 = vector.load %arg11[%c0_30, %c0_31] : memref<1x256xf32, #tpu.memory_space<vmem>>, vector<1x256xf32>
    %48 = vector.broadcast %47 : vector<1x256xf32> to vector<8x256xf32>
    %49 = arith.addf %46, %48 : vector<8x256xf32>
    %50 = vector.extract_strided_slice %49 {offsets = [0, 0], sizes = [8, 8], strides = [1, 1]} : vector<8x256xf32> to vector<8x8xf32>
    %51 = vector.extract_strided_slice %49 {offsets = [0, 128], sizes = [8, 8], strides = [1, 1]} : vector<8x256xf32> to vector<8x8xf32>
    %cst_32 = arith.constant 5.000000e-01 : f32
    %52 = vector.broadcast %cst_32 : f32 to vector<8x8xf32>
    %53 = arith.mulf %52, %51 : vector<8x8xf32>
    %54 = math.exp %53 : vector<8x8xf32>
    %55 = arith.mulf %54, %8 : vector<8x8xf32>
    %56 = arith.addf %50, %55 : vector<8x8xf32>
    %57 = tpu.concatenate %56, %6 in 1 : vector<8x8xf32>, vector<8x4xf32> -> vector<8x12xf32>
    %58 = tpu.concatenate %57, %9 in 1 : vector<8x12xf32>, vector<8x32xf32> -> vector<8x44xf32>
    %c0_33 = arith.constant 0 : index
    %c0_34 = arith.constant 0 : index
    %59 = vector.load %arg12[%c0_33, %c0_34] : memref<44x384xf32, #tpu.memory_space<vmem>>, vector<44x384xf32>
    %cst_35 = arith.constant dense<0.000000e+00> : vector<8x384xf32>
    %60 = tpu.matmul %58, %59, %cst_35 {dimension_numbers = #tpu.dot_dimension_numbers<[1], [0], [0], [1], [0, 0, 1, 1], [], []>} : vector<8x44xf32>, vector<44x384xf32>, vector<8x384xf32> -> vector<8x384xf32>
    %c0_36 = arith.constant 0 : index
    %c0_37 = arith.constant 0 : index
    %61 = vector.load %arg13[%c0_36, %c0_37] : memref<1x384xf32, #tpu.memory_space<vmem>>, vector<1x384xf32>
    %62 = vector.broadcast %61 : vector<1x384xf32> to vector<8x384xf32>
    %63 = arith.addf %60, %62 : vector<8x384xf32>
    %64 = vector.extract_strided_slice %63 {offsets = [0, 0], sizes = [8, 32], strides = [1, 1]} : vector<8x384xf32> to vector<8x32xf32>
    %65 = arith.negf %64 : vector<8x32xf32>
    %66 = math.exp %65 : vector<8x32xf32>
    %cst_38 = arith.constant 1.000000e+00 : f32
    %67 = vector.broadcast %cst_38 : f32 to vector<8x32xf32>
    %68 = arith.addf %67, %66 : vector<8x32xf32>
    %69 = arith.divf %67, %68 : vector<8x32xf32>
    %70 = vector.extract_strided_slice %63 {offsets = [0, 128], sizes = [8, 32], strides = [1, 1]} : vector<8x384xf32> to vector<8x32xf32>
    %71 = arith.negf %70 : vector<8x32xf32>
    %72 = math.exp %71 : vector<8x32xf32>
    %cst_39 = arith.constant 1.000000e+00 : f32
    %73 = vector.broadcast %cst_39 : f32 to vector<8x32xf32>
    %74 = arith.addf %73, %72 : vector<8x32xf32>
    %75 = arith.divf %73, %74 : vector<8x32xf32>
    %76 = arith.mulf %75, %9 : vector<8x32xf32>
    %c0_40 = arith.constant 0 : index
    %c0_41 = arith.constant 0 : index
    %77 = vector.load %arg14[%c0_40, %c0_41] : memref<32x32xf32, #tpu.memory_space<vmem>>, vector<32x32xf32>
    %cst_42 = arith.constant dense<0.000000e+00> : vector<8x32xf32>
    %78 = tpu.matmul %76, %77, %cst_42 {dimension_numbers = #tpu.dot_dimension_numbers<[1], [0], [0], [1], [0, 0, 1, 1], [], []>} : vector<8x32xf32>, vector<32x32xf32>, vector<8x32xf32> -> vector<8x32xf32>
    %79 = vector.extract_strided_slice %63 {offsets = [0, 256], sizes = [8, 32], strides = [1, 1]} : vector<8x384xf32> to vector<8x32xf32>
    %80 = arith.addf %79, %78 : vector<8x32xf32>
    %81 = math.tanh %80 : vector<8x32xf32>
    %82 = arith.mulf %69, %9 : vector<8x32xf32>
    %cst_43 = arith.constant 1.000000e+00 : f32
    %83 = vector.broadcast %cst_43 : f32 to vector<8x32xf32>
    %84 = arith.subf %83, %69 : vector<8x32xf32>
    %85 = arith.mulf %84, %81 : vector<8x32xf32>
    %86 = arith.addf %82, %85 : vector<8x32xf32>
    %cst_44 = arith.constant -5.000000e+00 : f32
    %cst_45 = arith.constant 5.000000e+00 : f32
    %87 = vector.broadcast %cst_44 : f32 to vector<8x32xf32>
    %88 = arith.maximumf %87, %86 : vector<8x32xf32>
    %89 = vector.broadcast %cst_45 : f32 to vector<8x32xf32>
    %90 = arith.minimumf %89, %88 : vector<8x32xf32>
    %c0_46 = arith.constant 0 : index
    %c0_47 = arith.constant 0 : index
    %91 = vector.load %arg15[%c0_46, %c0_47] : memref<32x16xf32, #tpu.memory_space<vmem>>, vector<32x16xf32>
    %cst_48 = arith.constant dense<0.000000e+00> : vector<8x16xf32>
    %92 = tpu.matmul %90, %91, %cst_48 {dimension_numbers = #tpu.dot_dimension_numbers<[1], [0], [0], [1], [0, 0, 1, 1], [], []>} : vector<8x32xf32>, vector<32x16xf32>, vector<8x16xf32> -> vector<8x16xf32>
    %c0_49 = arith.constant 0 : index
    %c0_50 = arith.constant 0 : index
    %93 = vector.load %arg22[%c0_49, %c0_50] : memref<8x32xf32, #tpu.memory_space<vmem>>, vector<8x32xf32>
    tpu.vector_store %arg22[%c0_49, %c0_50], %90 {strides = array<i32>} : memref<8x32xf32, #tpu.memory_space<vmem>>, vector<8x32xf32>,
    %c0_51 = arith.constant 0 : index
    %c0_52 = arith.constant 0 : index
    %94 = vector.load %arg23[%c0_51, %c0_52] : memref<8x16xf32, #tpu.memory_space<vmem>>, vector<8x16xf32>
    tpu.vector_store %arg23[%c0_51, %c0_52], %44 {strides = array<i32>} : memref<8x16xf32, #tpu.memory_space<vmem>>, vector<8x16xf32>,
    %c0_53 = arith.constant 0 : index
    %c0_54 = arith.constant 0 : index
    %95 = vector.load %arg24[%c0_53, %c0_54] : memref<8x16xf32, #tpu.memory_space<vmem>>, vector<8x16xf32>
    tpu.vector_store %arg24[%c0_53, %c0_54], %92 {strides = array<i32>} : memref<8x16xf32, #tpu.memory_space<vmem>>, vector<8x16xf32>,
    %c0_55 = arith.constant 0 : index
    %c0_56 = arith.constant 0 : index
    %c0_57 = arith.constant 0 : index
    %96 = vector.load %arg16[%c0_55, %c0_56, %c0_57] : memref<1x8x32xf32, #tpu.memory_space<vmem>>, vector<1x8x32xf32>
    %97 = vector.shape_cast %96 : vector<1x8x32xf32> to vector<8x32xf32>
    %98 = vector.shape_cast %90 : vector<8x32xf32> to vector<1x8x32xf32>
    tpu.vector_store %arg16[%c0_55, %c0_56, %c0_57], %98 {strides = array<i32>} : memref<1x8x32xf32, #tpu.memory_space<vmem>>, vector<1x8x32xf32>,
    %c0_58 = arith.constant 0 : index
    %c0_59 = arith.constant 0 : index
    %c0_60 = arith.constant 0 : index
    %99 = vector.load %arg17[%c0_58, %c0_59, %c0_60] : memref<1x8x16xf32, #tpu.memory_space<vmem>>, vector<1x8x16xf32>
    %100 = vector.shape_cast %99 : vector<1x8x16xf32> to vector<8x16xf32>
    %101 = vector.shape_cast %44 : vector<8x16xf32> to vector<1x8x16xf32>
    tpu.vector_store %arg17[%c0_58, %c0_59, %c0_60], %101 {strides = array<i32>} : memref<1x8x16xf32, #tpu.memory_space<vmem>>, vector<1x8x16xf32>,
    %c0_61 = arith.constant 0 : index
    %c0_62 = arith.constant 0 : index
    %c0_63 = arith.constant 0 : index
    %102 = vector.load %arg18[%c0_61, %c0_62, %c0_63] : memref<1x8x8xf32, #tpu.memory_space<vmem>>, vector<1x8x8xf32>
    %103 = vector.shape_cast %102 : vector<1x8x8xf32> to vector<8x8xf32>
    %104 = vector.shape_cast %50 : vector<8x8xf32> to vector<1x8x8xf32>
    tpu.vector_store %arg18[%c0_61, %c0_62, %c0_63], %104 {strides = array<i32>} : memref<1x8x8xf32, #tpu.memory_space<vmem>>, vector<1x8x8xf32>,
    %c0_64 = arith.constant 0 : index
    %c0_65 = arith.constant 0 : index
    %c0_66 = arith.constant 0 : index
    %105 = vector.load %arg19[%c0_64, %c0_65, %c0_66] : memref<1x8x8xf32, #tpu.memory_space<vmem>>, vector<1x8x8xf32>
    %106 = vector.shape_cast %105 : vector<1x8x8xf32> to vector<8x8xf32>
    %107 = vector.shape_cast %54 : vector<8x8xf32> to vector<1x8x8xf32>
    tpu.vector_store %arg19[%c0_64, %c0_65, %c0_66], %107 {strides = array<i32>} : memref<1x8x8xf32, #tpu.memory_space<vmem>>, vector<1x8x8xf32>,
    %c0_67 = arith.constant 0 : index
    %c0_68 = arith.constant 0 : index
    %c0_69 = arith.constant 0 : index
    %108 = vector.load %arg20[%c0_67, %c0_68, %c0_69] : memref<1x8x12xf32, #tpu.memory_space<vmem>>, vector<1x8x12xf32>
    %109 = vector.shape_cast %108 : vector<1x8x12xf32> to vector<8x12xf32>
    %110 = vector.shape_cast %57 : vector<8x12xf32> to vector<1x8x12xf32>
    tpu.vector_store %arg20[%c0_67, %c0_68, %c0_69], %110 {strides = array<i32>} : memref<1x8x12xf32, #tpu.memory_space<vmem>>, vector<1x8x12xf32>,
    %c0_70 = arith.constant 0 : index
    %c0_71 = arith.constant 0 : index
    %c0_72 = arith.constant 0 : index
    %111 = vector.load %arg21[%c0_70, %c0_71, %c0_72] : memref<1x8x16xf32, #tpu.memory_space<vmem>>, vector<1x8x16xf32>
    %112 = vector.shape_cast %111 : vector<1x8x16xf32> to vector<8x16xf32>
    %113 = vector.shape_cast %92 : vector<8x16xf32> to vector<1x8x16xf32>
    tpu.vector_store %arg21[%c0_70, %c0_71, %c0_72], %113 {strides = array<i32>} : memref<1x8x16xf32, #tpu.memory_space<vmem>>, vector<1x8x16xf32>,
    return
  }
  func.func @transform_0(%arg0: i32) -> (i32, i32, i32) {
    %c0_i32 = arith.constant 0 : i32
    %c0_i32_0 = arith.constant 0 : i32
    %c0_i32_1 = arith.constant 0 : i32
    return %arg0, %c0_i32, %c0_i32_0 : i32, i32, i32
  }
  func.func @transform_1(%arg0: i32) -> (i32, i32, i32) {
    %c0_i32 = arith.constant 0 : i32
    %c0_i32_0 = arith.constant 0 : i32
    %c0_i32_1 = arith.constant 0 : i32
    return %arg0, %c0_i32, %c0_i32_0 : i32, i32, i32
  }
  func.func @transform_2(%arg0: i32) -> (i32, i32, i32) {
    %c0_i32 = arith.constant 0 : i32
    %c0_i32_0 = arith.constant 0 : i32
    %c0_i32_1 = arith.constant 0 : i32
    return %arg0, %c0_i32, %c0_i32_0 : i32, i32, i32
  }
  func.func @transform_3(%arg0: i32) -> (i32, i32) {
    %c0_i32 = arith.constant 0 : i32
    %c0_i32_0 = arith.constant 0 : i32
    %c0_i32_1 = arith.constant 0 : i32
    return %c0_i32, %c0_i32_0 : i32, i32
  }
  func.func @transform_4(%arg0: i32) -> (i32, i32) {
    %c0_i32 = arith.constant 0 : i32
    %c0_i32_0 = arith.constant 0 : i32
    %c0_i32_1 = arith.constant 0 : i32
    return %c0_i32, %c0_i32_0 : i32, i32
  }
  func.func @transform_5(%arg0: i32) -> (i32, i32) {
    %c0_i32 = arith.constant 0 : i32
    %c0_i32_0 = arith.constant 0 : i32
    %c0_i32_1 = arith.constant 0 : i32
    return %c0_i32, %c0_i32_0 : i32, i32
  }
  func.func @transform_6(%arg0: i32) -> (i32, i32) {
    %c0_i32 = arith.constant 0 : i32
    %c0_i32_0 = arith.constant 0 : i32
    %c0_i32_1 = arith.constant 0 : i32
    return %c0_i32, %c0_i32_0 : i32, i32
  }
  func.func @transform_7(%arg0: i32) -> (i32, i32) {
    %c0_i32 = arith.constant 0 : i32
    %c0_i32_0 = arith.constant 0 : i32
    %c0_i32_1 = arith.constant 0 : i32
    return %c0_i32, %c0_i32_0 : i32, i32
  }
  func.func @transform_8(%arg0: i32) -> (i32, i32) {
    %c0_i32 = arith.constant 0 : i32
    %c0_i32_0 = arith.constant 0 : i32
    %c0_i32_1 = arith.constant 0 : i32
    return %c0_i32, %c0_i32_0 : i32, i32
  }
  func.func @transform_9(%arg0: i32) -> (i32, i32) {
    %c0_i32 = arith.constant 0 : i32
    %c0_i32_0 = arith.constant 0 : i32
    %c0_i32_1 = arith.constant 0 : i32
    return %c0_i32, %c0_i32_0 : i32, i32
  }
  func.func @transform_10(%arg0: i32) -> (i32, i32) {
    %c0_i32 = arith.constant 0 : i32
    %c0_i32_0 = arith.constant 0 : i32
    %c0_i32_1 = arith.constant 0 : i32
    return %c0_i32, %c0_i32_0 : i32, i32
  }
  func.func @transform_11(%arg0: i32) -> (i32, i32) {
    %c0_i32 = arith.constant 0 : i32
    %c0_i32_0 = arith.constant 0 : i32
    %c0_i32_1 = arith.constant 0 : i32
    return %c0_i32, %c0_i32_0 : i32, i32
  }
  func.func @transform_12(%arg0: i32) -> (i32, i32) {
    %c0_i32 = arith.constant 0 : i32
    %c0_i32_0 = arith.constant 0 : i32
    %c0_i32_1 = arith.constant 0 : i32
    return %c0_i32, %c0_i32_0 : i32, i32
  }
  func.func @transform_13(%arg0: i32) -> (i32, i32) {
    %c0_i32 = arith.constant 0 : i32
    %c0_i32_0 = arith.constant 0 : i32
    %c0_i32_1 = arith.constant 0 : i32
    return %c0_i32, %c0_i32_0 : i32, i32
  }
  func.func @transform_14(%arg0: i32) -> (i32, i32) {
    %c0_i32 = arith.constant 0 : i32
    %c0_i32_0 = arith.constant 0 : i32
    %c0_i32_1 = arith.constant 0 : i32
    return %c0_i32, %c0_i32_0 : i32, i32
  }
  func.func @transform_15(%arg0: i32) -> (i32, i32, i32) {
    %c0_i32 = arith.constant 0 : i32
    %c0_i32_0 = arith.constant 0 : i32
    %c0_i32_1 = arith.constant 0 : i32
    return %arg0, %c0_i32, %c0_i32_0 : i32, i32, i32
  }
  func.func @transform_16(%arg0: i32) -> (i32, i32, i32) {
    %c0_i32 = arith.constant 0 : i32
    %c0_i32_0 = arith.constant 0 : i32
    %c0_i32_1 = arith.constant 0 : i32
    return %arg0, %c0_i32, %c0_i32_0 : i32, i32, i32
  }
  func.func @transform_17(%arg0: i32) -> (i32, i32, i32) {
    %c0_i32 = arith.constant 0 : i32
    %c0_i32_0 = arith.constant 0 : i32
    %c0_i32_1 = arith.constant 0 : i32
    return %arg0, %c0_i32, %c0_i32_0 : i32, i32, i32
  }
  func.func @transform_18(%arg0: i32) -> (i32, i32, i32) {
    %c0_i32 = arith.constant 0 : i32
    %c0_i32_0 = arith.constant 0 : i32
    %c0_i32_1 = arith.constant 0 : i32
    return %arg0, %c0_i32, %c0_i32_0 : i32, i32, i32
  }
  func.func @transform_19(%arg0: i32) -> (i32, i32, i32) {
    %c0_i32 = arith.constant 0 : i32
    %c0_i32_0 = arith.constant 0 : i32
    %c0_i32_1 = arith.constant 0 : i32
    return %arg0, %c0_i32, %c0_i32_0 : i32, i32, i32
  }
  func.func @transform_20(%arg0: i32) -> (i32, i32, i32) {
    %c0_i32 = arith.constant 0 : i32
    %c0_i32_0 = arith.constant 0 : i32
    %c0_i32_1 = arith.constant 0 : i32
    return %arg0, %c0_i32, %c0_i32_0 : i32, i32, i32
  }
}

</mosaic_0001>

<llo_original>
// kernel: decoder_rollout.1
$region0: #{decoder_rollout.1}
  #allocation0 [shape = 'u32[]', space=smem, size = 0x4, offset = 0x4, fixed_abs, tag = 'smem constant byte address 0x4 - core index']
  #allocation1 [shape = 'u32[144,128]{1,0:T(1,128)}', space=vmem, size = 0x12000, scoped, tag = 'internal scratch']
  #allocation2 [shape = 'f32[8,32]{1,0:T(8,128)}', space=vmem, size = 0x1000, scoped, tag = 'scratch operand']
  #allocation3 [shape = 'f32[8,16]{1,0:T(8,128)}', space=vmem, size = 0x1000, scoped, tag = 'scratch operand']
  #allocation4 [shape = 'f32[8,16]{1,0:T(8,128)}', space=vmem, size = 0x1000, scoped, tag = 'scratch operand']
  %s0 = inlined_call_operand.vmem [shape: f32[16,8,16], index: 0, kind: input, shape index: {}]
  %s1 = inlined_call_operand.vmem [shape: f32[16,8,4], index: 1, kind: input, shape index: {}]
  %s2 = inlined_call_operand.vmem [shape: f32[16,8,8], index: 2, kind: input, shape index: {}]
  %s3 = inlined_call_operand.vmem [shape: f32[8,32], index: 3, kind: input, shape index: {}]
  %s4 = inlined_call_operand.vmem [shape: f32[8,16], index: 4, kind: input, shape index: {}]
  %s5 = inlined_call_operand.vmem [shape: f32[8,16], index: 5, kind: input, shape index: {}]
  %s6 = inlined_call_operand.vmem [shape: f32[48,384], index: 6, kind: input, shape index: {}]
  %s7 = inlined_call_operand.vmem [shape: f32[1,384], index: 7, kind: input, shape index: {}]
  %s8 = inlined_call_operand.vmem [shape: f32[16,16], index: 8, kind: input, shape index: {}]
  %s9 = inlined_call_operand.hbm [shape: f32[16,256], index: 9, kind: input, shape index: {}]
  %s10 = inlined_call_operand.vmem [shape: f32[1,256], index: 10, kind: input, shape index: {}]
  %s11 = inlined_call_operand.vmem [shape: f32[44,384], index: 11, kind: input, shape index: {}]
  %s12 = inlined_call_operand.vmem [shape: f32[1,384], index: 12, kind: input, shape index: {}]
  %s13 = inlined_call_operand.hbm [shape: f32[32,32], index: 13, kind: input, shape index: {}]
  %s14 = inlined_call_operand.vmem [shape: f32[32,16], index: 14, kind: input, shape index: {}]
  %s15 = inlined_call_operand.vmem [shape: f32[16,8,32], index: 15, kind: output, shape index: {0}]
  %s16 = inlined_call_operand.vmem [shape: f32[16,8,16], index: 16, kind: output, shape index: {1}]
  %s17 = inlined_call_operand.vmem [shape: f32[16,8,8], index: 17, kind: output, shape index: {2}]
  %s18 = inlined_call_operand.vmem [shape: f32[16,8,8], index: 18, kind: output, shape index: {3}]
  %s19 = inlined_call_operand.vmem [shape: f32[16,8,12], index: 19, kind: output, shape index: {4}]
  %s20 = inlined_call_operand.vmem [shape: f32[16,8,16], index: 20, kind: output, shape index: {5}]
  %21 = xla_tuple %s15, %s16, %s17, %s18, %s19, %s20
  %s22 = sld [smem:[#allocation0]]
  $region145: #{decoder_rollout.1} parent=0
    _
  %s24 = ssub.s32 1, %s22
  %s25 = scalar_select 0, %s24, %s22
  $region1: #{decoder_rollout.1} parent=0
    #allocation5 [shape = 'u8[16384]{0}', space=vmem, size = 0x4000, scoped, tag = 'input window, operand 9, single buffered']
    #allocation6 [shape = 's32[2]{0}', space=sflag, size = 0x8, scoped, tag = 'scoped memory for decoder_rollout.1']
    #allocation7 [shape = 'u8[16384]{0}', space=vmem, size = 0x4000, scoped, tag = 'input window, operand 13, single buffered']
    #allocation8 [shape = 's32[1]{0}', space=sflag, size = 0x4, scoped, tag = 'scoped memory for decoder_rollout.1']
    %26 = vsyncpa [#allocation6], 0
    %27 = vsyncpa [#allocation8], 0
    loop: start=0, step=1, limit=18
    $region2: #{decoder_rollout.1} parent=1 // loop_pre_header
      _
    $region3: #{decoder_rollout.1} parent=1 // loop_header
      %s29 = sphi 0, %s33
      %p30 = scmp.ge.s32.totalorder %s29, 18
      %s39 = sphi 0, %s41
      %s42 = sphi 0, %s39
      %s43 = sphi 0, %s42
      %s59 = sphi 0, %s43
      %s65 = sphi 0, %s67
      %s68 = sphi 0, %s65
      %s69 = sphi 0, %s68
      %s85 = sphi 0, %s69
      %s91 = sphi 0, %s93
      %s94 = sphi 0, %s91
      %s95 = sphi 0, %s94
      %s111 = sphi 0, %s95
      %s115 = sphi 0, %s115
      %s117 = sphi 0, %s115
      %s118 = sphi 0, %s117
      %s132 = sphi 0, %s118
      %s136 = sphi 0, %s136
      %s138 = sphi 0, %s136
      %s139 = sphi 0, %s138
      %s153 = sphi 0, %s139
      %s157 = sphi 0, %s157
      %s159 = sphi 0, %s157
      %s160 = sphi 0, %s159
      %s174 = sphi 0, %s160
      %s178 = sphi 0, %s178
      %s180 = sphi 0, %s178
      %s181 = sphi 0, %s180
      %s195 = sphi 0, %s181
      %s199 = sphi 0, %s199
      %s201 = sphi 0, %s199
      %s202 = sphi 0, %s201
      %s216 = sphi 0, %s202
      %s220 = sphi 0, %s220
      %s222 = sphi 0, %s220
      %s223 = sphi 0, %s222
      %s237 = sphi 0, %s223
      %s241 = sphi 0, %s241
      %s243 = sphi 0, %s241
      %s244 = sphi 0, %s243
      %s258 = sphi 0, %s244
      %s262 = sphi 0, %s262
      %s264 = sphi 0, %s262
      %s265 = sphi 0, %s264
      %s279 = sphi 0, %s265
      %s283 = sphi 0, %s283
      %s285 = sphi 0, %s283
      %s286 = sphi 0, %s285
      %s300 = sphi 0, %s286
      %s304 = sphi 0, %s304
      %s306 = sphi 0, %s304
      %s307 = sphi 0, %s306
      %s321 = sphi 0, %s307
      %s325 = sphi 0, %s325
      %s327 = sphi 0, %s325
      %s328 = sphi 0, %s327
      %s342 = sphi 0, %s328
      %s346 = sphi 0, %s346
      %s348 = sphi 0, %s346
      %s349 = sphi 0, %s348
      %s363 = sphi 0, %s349
      %s369 = sphi 0, %s371
      %s372 = sphi 0, %s369
      %s373 = sphi 0, %s372
      %s389 = sphi 0, %s373
      %s395 = sphi 0, %s397
      %s398 = sphi 0, %s395
      %s399 = sphi 0, %s398
      %s415 = sphi 0, %s399
      %s421 = sphi 0, %s423
      %s424 = sphi 0, %s421
      %s425 = sphi 0, %s424
      %s441 = sphi 0, %s425
      %s447 = sphi 0, %s449
      %s450 = sphi 0, %s447
      %s451 = sphi 0, %s450
      %s467 = sphi 0, %s451
      %s473 = sphi 0, %s475
      %s476 = sphi 0, %s473
      %s477 = sphi 0, %s476
      %s493 = sphi 0, %s477
      %s499 = sphi 0, %s501
      %s502 = sphi 0, %s499
      %s503 = sphi 0, %s502
      %s519 = sphi 0, %s503
    $region4: #{decoder_rollout.1} parent=1 // loop_header_branch
      %32 = sbr.rel (%p30) target = $region8
    $region5: #{decoder_rollout.1} parent=1 // loop_body
      %s34 = ssub.s32 %s29, 1
      %s35 = ssub.s32 %s29, 2
      %s36 = sadd.s32 %s29, 1
      %s37 = ssub.s32 %s29, %s36
      %p38 = scmp.eq.s32.totalorder %s37, 0
      %s40 = sadd.s32 %s39, 1
      %s41 = scalar_select %p38, %s39, %s40
      %p44 = pneg %p38
      %p45 = scmp.eq.s32.totalorder %s29, 15
      %p46 = por %p44, %p45
      %p47 = scmp.ne.s32.totalorder %s39, %s42
      %p48 = scmp.eq.s32.totalorder %s29, 0
      %p49 = por %p47, %p48
      %p50 = scmp.ne.s32.totalorder %s39, %s42
      %p51 = scmp.eq.s32.totalorder %s34, 15
      %p52 = por %p50, %p51
      %p53 = scmp.ne.s32.totalorder %s42, %s43
      %p54 = scmp.eq.s32.totalorder %s34, 0
      %p55 = por %p53, %p54
      %p56 = scmp.ne.s32.totalorder %s42, %s43
      %p57 = scmp.eq.s32.totalorder %s35, 15
      %p58 = por %p56, %p57
      %p60 = scmp.ne.s32.totalorder %s43, %s59
      %p61 = scmp.eq.s32.totalorder %s35, 0
      %p62 = por %p60, %p61
      %s63 = ssub.s32 %s29, %s36
      %p64 = scmp.eq.s32.totalorder %s63, 0
      %s66 = sadd.s32 %s65, 1
      %s67 = scalar_select %p64, %s65, %s66
      %p70 = pneg %p64
      %p71 = scmp.eq.s32.totalorder %s29, 15
      %p72 = por %p70, %p71
      %p73 = scmp.ne.s32.totalorder %s65, %s68
      %p74 = scmp.eq.s32.totalorder %s29, 0
      %p75 = por %p73, %p74
      %p76 = scmp.ne.s32.totalorder %s65, %s68
      %p77 = scmp.eq.s32.totalorder %s34, 15
      %p78 = por %p76, %p77
      %p79 = scmp.ne.s32.totalorder %s68, %s69
      %p80 = scmp.eq.s32.totalorder %s34, 0
      %p81 = por %p79, %p80
      %p82 = scmp.ne.s32.totalorder %s68, %s69
      %p83 = scmp.eq.s32.totalorder %s35, 15
      %p84 = por %p82, %p83
      %p86 = scmp.ne.s32.totalorder %s69, %s85
      %p87 = scmp.eq.s32.totalorder %s35, 0
      %p88 = por %p86, %p87
      %s89 = ssub.s32 %s29, %s36
      %p90 = scmp.eq.s32.totalorder %s89, 0
      %s92 = sadd.s32 %s91, 1
      %s93 = scalar_select %p90, %s91, %s92
      %p96 = pneg %p90
      %p97 = scmp.eq.s32.totalorder %s29, 15
      %p98 = por %p96, %p97
      %p99 = scmp.ne.s32.totalorder %s91, %s94
      %p100 = scmp.eq.s32.totalorder %s29, 0
      %p101 = por %p99, %p100
      %p102 = scmp.ne.s32.totalorder %s91, %s94
      %p103 = scmp.eq.s32.totalorder %s34, 15
      %p104 = por %p102, %p103
      %p105 = scmp.ne.s32.totalorder %s94, %s95
      %p106 = scmp.eq.s32.totalorder %s34, 0
      %p107 = por %p105, %p106
      %p108 = scmp.ne.s32.totalorder %s94, %s95
      %p109 = scmp.eq.s32.totalorder %s35, 15
      %p110 = por %p108, %p109
      %p112 = scmp.ne.s32.totalorder %s95, %s111
      %p113 = scmp.eq.s32.totalorder %s35, 0
      %p114 = por %p112, %p113
      %s116 = sadd.s32 %s115, 1
      %p119 = scmp.eq.s32.totalorder %s29, 15
      %p120 = scmp.ne.s32.totalorder %s115, %s117
      %p121 = scmp.eq.s32.totalorder %s29, 0
      %p122 = por %p120, %p121
      %p123 = scmp.ne.s32.totalorder %s115, %s117
      %p124 = scmp.eq.s32.totalorder %s34, 15
      %p125 = por %p123, %p124
      %p126 = scmp.ne.s32.totalorder %s117, %s118
      %p127 = scmp.eq.s32.totalorder %s34, 0
      %p128 = por %p126, %p127
      %p129 = scmp.ne.s32.totalorder %s117, %s118
      %p130 = scmp.eq.s32.totalorder %s35, 15
      %p131 = por %p129, %p130
      %p133 = scmp.ne.s32.totalorder %s118, %s132
      %p134 = scmp.eq.s32.totalorder %s35, 0
      %p135 = por %p133, %p134
      %s137 = sadd.s32 %s136, 1
      %p140 = scmp.eq.s32.totalorder %s29, 15
      %p141 = scmp.ne.s32.totalorder %s136, %s138
      %p142 = scmp.eq.s32.totalorder %s29, 0
      %p143 = por %p141, %p142
      %p144 = scmp.ne.s32.totalorder %s136, %s138
      %p145 = scmp.eq.s32.totalorder %s34, 15
      %p146 = por %p144, %p145
      %p147 = scmp.ne.s32.totalorder %s138, %s139
      %p148 = scmp.eq.s32.totalorder %s34, 0
      %p149 = por %p147, %p148
      %p150 = scmp.ne.s32.totalorder %s138, %s139
      %p151 = scmp.eq.s32.totalorder %s35, 15
      %p152 = por %p150, %p151
      %p154 = scmp.ne.s32.totalorder %s139, %s153
      %p155 = scmp.eq.s32.totalorder %s35, 0
      %p156 = por %p154, %p155
      %s158 = sadd.s32 %s157, 1
      %p161 = scmp.eq.s32.totalorder %s29, 15
      %p162 = scmp.ne.s32.totalorder %s157, %s159
      %p163 = scmp.eq.s32.totalorder %s29, 0
      %p164 = por %p162, %p163
      %p165 = scmp.ne.s32.totalorder %s157, %s159
      %p166 = scmp.eq.s32.totalorder %s34, 15
      %p167 = por %p165, %p166
      %p168 = scmp.ne.s32.totalorder %s159, %s160
      %p169 = scmp.eq.s32.totalorder %s34, 0
      %p170 = por %p168, %p169
      %p171 = scmp.ne.s32.totalorder %s159, %s160
      %p172 = scmp.eq.s32.totalorder %s35, 15
      %p173 = por %p171, %p172
      %p175 = scmp.ne.s32.totalorder %s160, %s174
      %p176 = scmp.eq.s32.totalorder %s35, 0
      %p177 = por %p175, %p176
      %s179 = sadd.s32 %s178, 1
      %p182 = scmp.eq.s32.totalorder %s29, 15
      %p183 = scmp.ne.s32.totalorder %s178, %s180
      %p184 = scmp.eq.s32.totalorder %s29, 0
      %p185 = por %p183, %p184
      %p186 = scmp.ne.s32.totalorder %s178, %s180
      %p187 = scmp.eq.s32.totalorder %s34, 15
      %p188 = por %p186, %p187
      %p189 = scmp.ne.s32.totalorder %s180, %s181
      %p190 = scmp.eq.s32.totalorder %s34, 0
      %p191 = por %p189, %p190
      %p192 = scmp.ne.s32.totalorder %s180, %s181
      %p193 = scmp.eq.s32.totalorder %s35, 15
      %p194 = por %p192, %p193
      %p196 = scmp.ne.s32.totalorder %s181, %s195
      %p197 = scmp.eq.s32.totalorder %s35, 0
      %p198 = por %p196, %p197
      %s200 = sadd.s32 %s199, 1
      %p203 = scmp.eq.s32.totalorder %s29, 15
      %p204 = scmp.ne.s32.totalorder %s199, %s201
      %p205 = scmp.eq.s32.totalorder %s29, 0
      %p206 = por %p204, %p205
      %p207 = scmp.ne.s32.totalorder %s199, %s201
      %p208 = scmp.eq.s32.totalorder %s34, 15
      %p209 = por %p207, %p208
      %p210 = scmp.ne.s32.totalorder %s201, %s202
      %p211 = scmp.eq.s32.totalorder %s34, 0
      %p212 = por %p210, %p211
      %p213 = scmp.ne.s32.totalorder %s201, %s202
      %p214 = scmp.eq.s32.totalorder %s35, 15
      %p215 = por %p213, %p214
      %p217 = scmp.ne.s32.totalorder %s202, %s216
      %p218 = scmp.eq.s32.totalorder %s35, 0
      %p219 = por %p217, %p218
      %s221 = sadd.s32 %s220, 1
      %p224 = scmp.eq.s32.totalorder %s29, 15
      %p225 = scmp.ne.s32.totalorder %s220, %s222
      %p226 = scmp.eq.s32.totalorder %s29, 0
      %p227 = por %p225, %p226
      %p228 = scmp.ne.s32.totalorder %s220, %s222
      %p229 = scmp.eq.s32.totalorder %s34, 15
      %p230 = por %p228, %p229
      %p231 = scmp.ne.s32.totalorder %s222, %s223
      %p232 = scmp.eq.s32.totalorder %s34, 0
      %p233 = por %p231, %p232
      %p234 = scmp.ne.s32.totalorder %s222, %s223
      %p235 = scmp.eq.s32.totalorder %s35, 15
      %p236 = por %p234, %p235
      %p238 = scmp.ne.s32.totalorder %s223, %s237
      %p239 = scmp.eq.s32.totalorder %s35, 0
      %p240 = por %p238, %p239
      %s242 = sadd.s32 %s241, 1
      %p245 = scmp.eq.s32.totalorder %s29, 15
      %p246 = scmp.ne.s32.totalorder %s241, %s243
      %p247 = scmp.eq.s32.totalorder %s29, 0
      %p248 = por %p246, %p247
      %p249 = scmp.ne.s32.totalorder %s241, %s243
      %p250 = scmp.eq.s32.totalorder %s34, 15
      %p251 = por %p249, %p250
      %p252 = scmp.ne.s32.totalorder %s243, %s244
      %p253 = scmp.eq.s32.totalorder %s34, 0
      %p254 = por %p252, %p253
      %p255 = scmp.ne.s32.totalorder %s243, %s244
      %p256 = scmp.eq.s32.totalorder %s35, 15
      %p257 = por %p255, %p256
      %p259 = scmp.ne.s32.totalorder %s244, %s258
      %p260 = scmp.eq.s32.totalorder %s35, 0
      %p261 = por %p259, %p260
      %s263 = sadd.s32 %s262, 1
      %p266 = scmp.eq.s32.totalorder %s29, 15
      %p267 = scmp.ne.s32.totalorder %s262, %s264
      %p268 = scmp.eq.s32.totalorder %s29, 0
      %p269 = por %p267, %p268
      %p270 = scmp.ne.s32.totalorder %s262, %s264
      %p271 = scmp.eq.s32.totalorder %s34, 15
      %p272 = por %p270, %p271
      %p273 = scmp.ne.s32.totalorder %s264, %s265
      %p274 = scmp.eq.s32.totalorder %s34, 0
      %p275 = por %p273, %p274
      %p276 = scmp.ne.s32.totalorder %s264, %s265
      %p277 = scmp.eq.s32.totalorder %s35, 15
      %p278 = por %p276, %p277
      %p280 = scmp.ne.s32.totalorder %s265, %s279
      %p281 = scmp.eq.s32.totalorder %s35, 0
      %p282 = por %p280, %p281
      %s284 = sadd.s32 %s283, 1
      %p287 = scmp.eq.s32.totalorder %s29, 15
      %p288 = scmp.ne.s32.totalorder %s283, %s285
      %p289 = scmp.eq.s32.totalorder %s29, 0
      %p290 = por %p288, %p289
      %p291 = scmp.ne.s32.totalorder %s283, %s285
      %p292 = scmp.eq.s32.totalorder %s34, 15
      %p293 = por %p291, %p292
      %p294 = scmp.ne.s32.totalorder %s285, %s286
      %p295 = scmp.eq.s32.totalorder %s34, 0
      %p296 = por %p294, %p295
      %p297 = scmp.ne.s32.totalorder %s285, %s286
      %p298 = scmp.eq.s32.totalorder %s35, 15
      %p299 = por %p297, %p298
      %p301 = scmp.ne.s32.totalorder %s286, %s300
      %p302 = scmp.eq.s32.totalorder %s35, 0
      %p303 = por %p301, %p302
      %s305 = sadd.s32 %s304, 1
      %p308 = scmp.eq.s32.totalorder %s29, 15
      %p309 = scmp.ne.s32.totalorder %s304, %s306
      %p310 = scmp.eq.s32.totalorder %s29, 0
      %p311 = por %p309, %p310
      %p312 = scmp.ne.s32.totalorder %s304, %s306
      %p313 = scmp.eq.s32.totalorder %s34, 15
      %p314 = por %p312, %p313
      %p315 = scmp.ne.s32.totalorder %s306, %s307
      %p316 = scmp.eq.s32.totalorder %s34, 0
      %p317 = por %p315, %p316
      %p318 = scmp.ne.s32.totalorder %s306, %s307
      %p319 = scmp.eq.s32.totalorder %s35, 15
      %p320 = por %p318, %p319
      %p322 = scmp.ne.s32.totalorder %s307, %s321
      %p323 = scmp.eq.s32.totalorder %s35, 0
      %p324 = por %p322, %p323
      %s326 = sadd.s32 %s325, 1
      %p329 = scmp.eq.s32.totalorder %s29, 15
      %p330 = scmp.ne.s32.totalorder %s325, %s327
      %p331 = scmp.eq.s32.totalorder %s29, 0
      %p332 = por %p330, %p331
      %p333 = scmp.ne.s32.totalorder %s325, %s327
      %p334 = scmp.eq.s32.totalorder %s34, 15
      %p335 = por %p333, %p334
      %p336 = scmp.ne.s32.totalorder %s327, %s328
      %p337 = scmp.eq.s32.totalorder %s34, 0
      %p338 = por %p336, %p337
      %p339 = scmp.ne.s32.totalorder %s327, %s328
      %p340 = scmp.eq.s32.totalorder %s35, 15
      %p341 = por %p339, %p340
      %p343 = scmp.ne.s32.totalorder %s328, %s342
      %p344 = scmp.eq.s32.totalorder %s35, 0
      %p345 = por %p343, %p344
      %s347 = sadd.s32 %s346, 1
      %p350 = scmp.eq.s32.totalorder %s29, 15
      %p351 = scmp.ne.s32.totalorder %s346, %s348
      %p352 = scmp.eq.s32.totalorder %s29, 0
      %p353 = por %p351, %p352
      %p354 = scmp.ne.s32.totalorder %s346, %s348
      %p355 = scmp.eq.s32.totalorder %s34, 15
      %p356 = por %p354, %p355
      %p357 = scmp.ne.s32.totalorder %s348, %s349
      %p358 = scmp.eq.s32.totalorder %s34, 0
      %p359 = por %p357, %p358
      %p360 = scmp.ne.s32.totalorder %s348, %s349
      %p361 = scmp.eq.s32.totalorder %s35, 15
      %p362 = por %p360, %p361
      %p364 = scmp.ne.s32.totalorder %s349, %s363
      %p365 = scmp.eq.s32.totalorder %s35, 0
      %p366 = por %p364, %p365
      %s367 = ssub.s32 %s29, %s36
      %p368 = scmp.eq.s32.totalorder %s367, 0
      %s370 = sadd.s32 %s369, 1
      %s371 = scalar_select %p368, %s369, %s370
      %p374 = pneg %p368
      %p375 = scmp.eq.s32.totalorder %s29, 15
      %p376 = por %p374, %p375
      %p377 = scmp.ne.s32.totalorder %s369, %s372
      %p378 = scmp.eq.s32.totalorder %s29, 0
      %p379 = por %p377, %p378
      %p380 = scmp.ne.s32.totalorder %s369, %s372
      %p381 = scmp.eq.s32.totalorder %s34, 15
      %p382 = por %p380, %p381
      %p383 = scmp.ne.s32.totalorder %s372, %s373
      %p384 = scmp.eq.s32.totalorder %s34, 0
      %p385 = por %p383, %p384
      %p386 = scmp.ne.s32.totalorder %s372, %s373
      %p387 = scmp.eq.s32.totalorder %s35, 15
      %p388 = por %p386, %p387
      %p390 = scmp.ne.s32.totalorder %s373, %s389
      %p391 = scmp.eq.s32.totalorder %s35, 0
      %p392 = por %p390, %p391
      %s393 = ssub.s32 %s29, %s36
      %p394 = scmp.eq.s32.totalorder %s393, 0
      %s396 = sadd.s32 %s395, 1
      %s397 = scalar_select %p394, %s395, %s396
      %p400 = pneg %p394
      %p401 = scmp.eq.s32.totalorder %s29, 15
      %p402 = por %p400, %p401
      %p403 = scmp.ne.s32.totalorder %s395, %s398
      %p404 = scmp.eq.s32.totalorder %s29, 0
      %p405 = por %p403, %p404
      %p406 = scmp.ne.s32.totalorder %s395, %s398
      %p407 = scmp.eq.s32.totalorder %s34, 15
      %p408 = por %p406, %p407
      %p409 = scmp.ne.s32.totalorder %s398, %s399
      %p410 = scmp.eq.s32.totalorder %s34, 0
      %p411 = por %p409, %p410
      %p412 = scmp.ne.s32.totalorder %s398, %s399
      %p413 = scmp.eq.s32.totalorder %s35, 15
      %p414 = por %p412, %p413
      %p416 = scmp.ne.s32.totalorder %s399, %s415
      %p417 = scmp.eq.s32.totalorder %s35, 0
      %p418 = por %p416, %p417
      %s419 = ssub.s32 %s29, %s36
      %p420 = scmp.eq.s32.totalorder %s419, 0
      %s422 = sadd.s32 %s421, 1
      %s423 = scalar_select %p420, %s421, %s422
      %p426 = pneg %p420
      %p427 = scmp.eq.s32.totalorder %s29, 15
      %p428 = por %p426, %p427
      %p429 = scmp.ne.s32.totalorder %s421, %s424
      %p430 = scmp.eq.s32.totalorder %s29, 0
      %p431 = por %p429, %p430
      %p432 = scmp.ne.s32.totalorder %s421, %s424
      %p433 = scmp.eq.s32.totalorder %s34, 15
      %p434 = por %p432, %p433
      %p435 = scmp.ne.s32.totalorder %s424, %s425
      %p436 = scmp.eq.s32.totalorder %s34, 0
      %p437 = por %p435, %p436
      %p438 = scmp.ne.s32.totalorder %s424, %s425
      %p439 = scmp.eq.s32.totalorder %s35, 15
      %p440 = por %p438, %p439
      %p442 = scmp.ne.s32.totalorder %s425, %s441
      %p443 = scmp.eq.s32.totalorder %s35, 0
      %p444 = por %p442, %p443
      %s445 = ssub.s32 %s29, %s36
      %p446 = scmp.eq.s32.totalorder %s445, 0
      %s448 = sadd.s32 %s447, 1
      %s449 = scalar_select %p446, %s447, %s448
      %p452 = pneg %p446
      %p453 = scmp.eq.s32.totalorder %s29, 15
      %p454 = por %p452, %p453
      %p455 = scmp.ne.s32.totalorder %s447, %s450
      %p456 = scmp.eq.s32.totalorder %s29, 0
      %p457 = por %p455, %p456
      %p458 = scmp.ne.s32.totalorder %s447, %s450
      %p459 = scmp.eq.s32.totalorder %s34, 15
      %p460 = por %p458, %p459
      %p461 = scmp.ne.s32.totalorder %s450, %s451
      %p462 = scmp.eq.s32.totalorder %s34, 0
      %p463 = por %p461, %p462
      %p464 = scmp.ne.s32.totalorder %s450, %s451
      %p465 = scmp.eq.s32.totalorder %s35, 15
      %p466 = por %p464, %p465
      %p468 = scmp.ne.s32.totalorder %s451, %s467
      %p469 = scmp.eq.s32.totalorder %s35, 0
      %p470 = por %p468, %p469
      %s471 = ssub.s32 %s29, %s36
      %p472 = scmp.eq.s32.totalorder %s471, 0
      %s474 = sadd.s32 %s473, 1
      %s475 = scalar_select %p472, %s473, %s474
      %p478 = pneg %p472
      %p479 = scmp.eq.s32.totalorder %s29, 15
      %p480 = por %p478, %p479
      %p481 = scmp.ne.s32.totalorder %s473, %s476
      %p482 = scmp.eq.s32.totalorder %s29, 0
      %p483 = por %p481, %p482
      %p484 = scmp.ne.s32.totalorder %s473, %s476
      %p485 = scmp.eq.s32.totalorder %s34, 15
      %p486 = por %p484, %p485
      %p487 = scmp.ne.s32.totalorder %s476, %s477
      %p488 = scmp.eq.s32.totalorder %s34, 0
      %p489 = por %p487, %p488
      %p490 = scmp.ne.s32.totalorder %s476, %s477
      %p491 = scmp.eq.s32.totalorder %s35, 15
      %p492 = por %p490, %p491
      %p494 = scmp.ne.s32.totalorder %s477, %s493
      %p495 = scmp.eq.s32.totalorder %s35, 0
      %p496 = por %p494, %p495
      %s497 = ssub.s32 %s29, %s36
      %p498 = scmp.eq.s32.totalorder %s497, 0
      %s500 = sadd.s32 %s499, 1
      %s501 = scalar_select %p498, %s499, %s500
      %p504 = pneg %p498
      %p505 = scmp.eq.s32.totalorder %s29, 15
      %p506 = por %p504, %p505
      %p507 = scmp.ne.s32.totalorder %s499, %s502
      %p508 = scmp.eq.s32.totalorder %s29, 0
      %p509 = por %p507, %p508
      %p510 = scmp.ne.s32.totalorder %s499, %s502
      %p511 = scmp.eq.s32.totalorder %s34, 15
      %p512 = por %p510, %p511
      %p513 = scmp.ne.s32.totalorder %s502, %s503
      %p514 = scmp.eq.s32.totalorder %s34, 0
      %p515 = por %p513, %p514
      %p516 = scmp.ne.s32.totalorder %s502, %s503
      %p517 = scmp.eq.s32.totalorder %s35, 15
      %p518 = por %p516, %p517
      %p520 = scmp.ne.s32.totalorder %s503, %s519
      %p521 = scmp.eq.s32.totalorder %s35, 0
      %p522 = por %p520, %p521
      %p523 = scmp.le.s32.totalorder 1, %s29
      %p524 = scmp.lt.s32.totalorder %s29, 17
      %p525 = pnand %p523, %p524
      %p526 = pneg %p525
      // Predicated region
      $region9: #{decoder_rollout.1} parent=5 // pred_check
        _
      $region10: #{decoder_rollout.1} parent=5 // pred_check_branch
        %528 = sbr.rel (%p525) target = $region12
      $region11: #{decoder_rollout.1} parent=5 // pred_region
        %s529 = ssub.s32 %s29, 1
        // Predicated region
        $region13: #{decoder_rollout.1} parent=11 // pred_check
          %p530 = pneg %p128
        $region14: #{decoder_rollout.1} parent=11 // pred_check_branch
          %532 = sbr.rel (%p530) target = $region16
        $region15: #{decoder_rollout.1} parent=11 // pred_region
          _
        $region16: #{decoder_rollout.1} parent=11 // pred_fallthru
          _
        // Predicated region
        $region17: #{decoder_rollout.1} parent=11 // pred_check
          %p533 = pneg %p149
        $region18: #{decoder_rollout.1} parent=11 // pred_check_branch
          %535 = sbr.rel (%p533) target = $region20
        $region19: #{decoder_rollout.1} parent=11 // pred_region
          _
        $region20: #{decoder_rollout.1} parent=11 // pred_fallthru
          _
        // Predicated region
        $region21: #{decoder_rollout.1} parent=11 // pred_check
          %p536 = pneg %p170
        $region22: #{decoder_rollout.1} parent=11 // pred_check_branch
          %538 = sbr.rel (%p536) target = $region24
        $region23: #{decoder_rollout.1} parent=11 // pred_region
          _
        $region24: #{decoder_rollout.1} parent=11 // pred_fallthru
          _
        // Predicated region
        $region25: #{decoder_rollout.1} parent=11 // pred_check
          %p539 = pneg %p191
        $region26: #{decoder_rollout.1} parent=11 // pred_check_branch
          %541 = sbr.rel (%p539) target = $region28
        $region27: #{decoder_rollout.1} parent=11 // pred_region
          _
        $region28: #{decoder_rollout.1} parent=11 // pred_fallthru
          _
        // Predicated region
        $region29: #{decoder_rollout.1} parent=11 // pred_check
          %p542 = pneg %p212
        $region30: #{decoder_rollout.1} parent=11 // pred_check_branch
          %544 = sbr.rel (%p542) target = $region32
        $region31: #{decoder_rollout.1} parent=11 // pred_region
          _
        $region32: #{decoder_rollout.1} parent=11 // pred_fallthru
          _
        // Predicated region
        $region33: #{decoder_rollout.1} parent=11 // pred_check
          %p545 = pneg %p233
        $region34: #{decoder_rollout.1} parent=11 // pred_check_branch
          %547 = sbr.rel (%p545) target = $region36
        $region35: #{decoder_rollout.1} parent=11 // pred_region
          _
        $region36: #{decoder_rollout.1} parent=11 // pred_fallthru
          _
        // Predicated region
        $region37: #{decoder_rollout.1} parent=11 // pred_check
          %p548 = pneg %p254
        $region38: #{decoder_rollout.1} parent=11 // pred_check_branch
          %550 = sbr.rel (%p548) target = $region40
        $region39: #{decoder_rollout.1} parent=11 // pred_region
          %s552 = ssub.s32 512, 512
          %553 = vsyncadd [#allocation6], %s552
          %s554 = sshll.u32 [#allocation5], 4
          %s555 = int_to_ptr.vmem [resolvable:$true] %s554
          %560 = dma.hbm_to_vmem [thread:$0]  %s9, 512, %s555, [#allocation6], 256, 256, 16
        $region40: #{decoder_rollout.1} parent=11 // pred_fallthru
          _
        // Predicated region
        $region41: #{decoder_rollout.1} parent=11 // pred_check
          %p561 = pneg %p275
        $region42: #{decoder_rollout.1} parent=11 // pred_check_branch
          %563 = sbr.rel (%p561) target = $region44
        $region43: #{decoder_rollout.1} parent=11 // pred_region
          _
        $region44: #{decoder_rollout.1} parent=11 // pred_fallthru
          _
        // Predicated region
        $region45: #{decoder_rollout.1} parent=11 // pred_check
          %p564 = pneg %p296
        $region46: #{decoder_rollout.1} parent=11 // pred_check_branch
          %566 = sbr.rel (%p564) target = $region48
        $region47: #{decoder_rollout.1} parent=11 // pred_region
          _
        $region48: #{decoder_rollout.1} parent=11 // pred_fallthru
          _
        // Predicated region
        $region49: #{decoder_rollout.1} parent=11 // pred_check
          %p567 = pneg %p317
        $region50: #{decoder_rollout.1} parent=11 // pred_check_branch
          %569 = sbr.rel (%p567) target = $region52
        $region51: #{decoder_rollout.1} parent=11 // pred_region
          _
        $region52: #{decoder_rollout.1} parent=11 // pred_fallthru
          _
        // Predicated region
        $region53: #{decoder_rollout.1} parent=11 // pred_check
          %p570 = pneg %p338
        $region54: #{decoder_rollout.1} parent=11 // pred_check_branch
          %572 = sbr.rel (%p570) target = $region56
        $region55: #{decoder_rollout.1} parent=11 // pred_region
          %s574 = ssub.s32 512, 512
          %575 = vsyncadd [#allocation8], %s574
          %s576 = sshll.u32 [#allocation7], 4
          %s577 = int_to_ptr.vmem [resolvable:$true] %s576
          %582 = dma.hbm_to_vmem [thread:$0]  %s13, 512, %s577, [#allocation8], 128, 128, 8
        $region56: #{decoder_rollout.1} parent=11 // pred_fallthru
          _
        // Predicated region
        $region57: #{decoder_rollout.1} parent=11 // pred_check
          %p583 = pneg %p359
        $region58: #{decoder_rollout.1} parent=11 // pred_check_branch
          %585 = sbr.rel (%p583) target = $region60
        $region59: #{decoder_rollout.1} parent=11 // pred_region
          _
        $region60: #{decoder_rollout.1} parent=11 // pred_fallthru
          _
      $region12: #{decoder_rollout.1} parent=5 // pred_fallthru
        _
      %p586 = scmp.lt.s32.totalorder %s29, 16
      // Predicated region
      $region61: #{decoder_rollout.1} parent=5 // pred_check
        %p587 = pneg %p586
      $region62: #{decoder_rollout.1} parent=5 // pred_check_branch
        %589 = sbr.rel (%p587) target = $region64
      $region63: #{decoder_rollout.1} parent=5 // pred_region
        // Predicated region
        $region65: #{decoder_rollout.1} parent=63 // pred_check
          %p590 = pneg %p49
        $region66: #{decoder_rollout.1} parent=63 // pred_check_branch
          %592 = sbr.rel (%p590) target = $region68
        $region67: #{decoder_rollout.1} parent=63 // pred_region
          %p593 = scmp.lt.s32.totalorder %s29, 15
          %s594 = scalar_select %p593, %s29, 15
          %s595 = smul.addr %s594, 8
          %s596 = scalar_lea.vmem %s0, %s595
        $region68: #{decoder_rollout.1} parent=63 // pred_fallthru
          _
        // Predicated region
        $region69: #{decoder_rollout.1} parent=63 // pred_check
          %p597 = pneg %p75
        $region70: #{decoder_rollout.1} parent=63 // pred_check_branch
          %599 = sbr.rel (%p597) target = $region72
        $region71: #{decoder_rollout.1} parent=63 // pred_region
          %p600 = scmp.lt.s32.totalorder %s29, 15
          %s601 = scalar_select %p600, %s29, 15
          %s602 = smul.addr %s601, 8
          %s603 = scalar_lea.vmem %s1, %s602
        $region72: #{decoder_rollout.1} parent=63 // pred_fallthru
          _
        // Predicated region
        $region73: #{decoder_rollout.1} parent=63 // pred_check
          %p604 = pneg %p101
        $region74: #{decoder_rollout.1} parent=63 // pred_check_branch
          %606 = sbr.rel (%p604) target = $region76
        $region75: #{decoder_rollout.1} parent=63 // pred_region
          %p607 = scmp.lt.s32.totalorder %s29, 15
          %s608 = scalar_select %p607, %s29, 15
          %s609 = smul.addr %s608, 8
          %s610 = scalar_lea.vmem %s2, %s609
        $region76: #{decoder_rollout.1} parent=63 // pred_fallthru
          _
      $region64: #{decoder_rollout.1} parent=5 // pred_fallthru
        _
      %p611 = scmp.le.s32.totalorder 1, %s29
      %p612 = scmp.lt.s32.totalorder %s29, 17
      %p613 = pnand %p611, %p612
      %p614 = pneg %p613
      // Predicated region
      $region77: #{decoder_rollout.1} parent=5 // pred_check
        _
      $region78: #{decoder_rollout.1} parent=5 // pred_check_branch
        %616 = sbr.rel (%p613) target = $region80
      $region79: #{decoder_rollout.1} parent=5 // pred_region
        %s617 = ssub.s32 %s29, 1
        // Predicated region
        $region81: #{decoder_rollout.1} parent=79 // pred_check
          %p618 = pneg %p254
        $region82: #{decoder_rollout.1} parent=79 // pred_check_branch
          %620 = sbr.rel (%p618) target = $region84
        $region83: #{decoder_rollout.1} parent=79 // pred_region
          %621 = dma.done [#allocation6], 512
        $region84: #{decoder_rollout.1} parent=79 // pred_fallthru
          _
        // Predicated region
        $region85: #{decoder_rollout.1} parent=79 // pred_check
          %p622 = pneg %p338
        $region86: #{decoder_rollout.1} parent=79 // pred_check_branch
          %624 = sbr.rel (%p622) target = $region88
        $region87: #{decoder_rollout.1} parent=79 // pred_region
          %625 = dma.done [#allocation8], 512
        $region88: #{decoder_rollout.1} parent=79 // pred_fallthru
          _
        %p626 = scmp.lt.s32.totalorder %s34, 15
        %s627 = scalar_select %p626, %s34, 15
        %s628 = smul.addr %s627, 8
        %s629 = scalar_lea.vmem %s0, %s628
        %p630 = pneg %p55
        %p631 = pneg %p52
        %p632 = scmp.lt.s32.totalorder %s34, 15
        %s633 = scalar_select %p632, %s34, 15
        %s634 = smul.addr %s633, 8
        %s635 = scalar_lea.vmem %s1, %s634
        %p636 = pneg %p81
        %p637 = pneg %p78
        %p638 = scmp.lt.s32.totalorder %s34, 15
        %s639 = scalar_select %p638, %s34, 15
        %s640 = smul.addr %s639, 8
        %s641 = scalar_lea.vmem %s2, %s640
        %p642 = pneg %p107
        %p643 = pneg %p104
        %p644 = pneg %p128
        %p645 = pneg %p125
        %p646 = pneg %p149
        %p647 = pneg %p146
        %p648 = pneg %p170
        %p649 = pneg %p167
        %p650 = pneg %p191
        %p651 = pneg %p188
        %p652 = pneg %p212
        %p653 = pneg %p209
        %p654 = pneg %p233
        %p655 = pneg %p230
        %p656 = pneg %p254
        %p657 = pneg %p251
        %p658 = pneg %p275
        %p659 = pneg %p272
        %p660 = pneg %p296
        %p661 = pneg %p293
        %p662 = pneg %p317
        %p663 = pneg %p314
        %p664 = pneg %p338
        %p665 = pneg %p335
        %p666 = pneg %p359
        %p667 = pneg %p356
        %p668 = pneg %p385
        %p669 = pneg %p382
        %p670 = scmp.lt.s32.totalorder %s34, 15
        %s671 = scalar_select %p670, %s34, 15
        %s672 = smul.addr %s671, 8
        %s673 = scalar_lea.vmem %s15, %s672
        %p674 = pneg %p411
        %p675 = pneg %p408
        %p676 = scmp.lt.s32.totalorder %s34, 15
        %s677 = scalar_select %p676, %s34, 15
        %s678 = smul.addr %s677, 8
        %s679 = scalar_lea.vmem %s16, %s678
        %p680 = pneg %p437
        %p681 = pneg %p434
        %p682 = scmp.lt.s32.totalorder %s34, 15
        %s683 = scalar_select %p682, %s34, 15
        %s684 = smul.addr %s683, 8
        %s685 = scalar_lea.vmem %s17, %s684
        %p686 = pneg %p463
        %p687 = pneg %p460
        %p688 = scmp.lt.s32.totalorder %s34, 15
        %s689 = scalar_select %p688, %s34, 15
        %s690 = smul.addr %s689, 8
        %s691 = scalar_lea.vmem %s18, %s690
        %p692 = pneg %p489
        %p693 = pneg %p486
        %p694 = scmp.lt.s32.totalorder %s34, 15
        %s695 = scalar_select %p694, %s34, 15
        %s696 = smul.addr %s695, 8
        %s697 = scalar_lea.vmem %s19, %s696
        %p698 = pneg %p515
        %p699 = pneg %p512
        %p700 = scmp.lt.s32.totalorder %s34, 15
        %s701 = scalar_select %p700, %s34, 15
        %s702 = smul.addr %s701, 8
        %s703 = scalar_lea.vmem %s20, %s702
        %p704 = scmp.lt.s32.totalorder %s34, 15
        %s705 = scalar_select %p704, %s34, 15
        %s706 = smul.addr %s705, 8
        %s707 = scalar_lea.vmem %s0, %s706
        %p708 = scmp.lt.s32.totalorder %s34, 15
        %s709 = scalar_select %p708, %s34, 15
        %s710 = smul.addr %s709, 8
        %s711 = scalar_lea.vmem %s1, %s710
        %p712 = scmp.lt.s32.totalorder %s34, 15
        %s713 = scalar_select %p712, %s34, 15
        %s714 = smul.addr %s713, 8
        %s715 = scalar_lea.vmem %s2, %s714
        %p716 = scmp.lt.s32.totalorder %s34, 15
        %s717 = scalar_select %p716, %s34, 15
        %s718 = smul.addr %s717, 8
        %s719 = scalar_lea.vmem %s15, %s718
        %p720 = scmp.lt.s32.totalorder %s34, 15
        %s721 = scalar_select %p720, %s34, 15
        %s722 = smul.addr %s721, 8
        %s723 = scalar_lea.vmem %s16, %s722
        %p724 = scmp.lt.s32.totalorder %s34, 15
        %s725 = scalar_select %p724, %s34, 15
        %s726 = smul.addr %s725, 8
        %s727 = scalar_lea.vmem %s17, %s726
        %p728 = scmp.lt.s32.totalorder %s34, 15
        %s729 = scalar_select %p728, %s34, 15
        %s730 = smul.addr %s729, 8
        %s731 = scalar_lea.vmem %s18, %s730
        %p732 = scmp.lt.s32.totalorder %s34, 15
        %s733 = scalar_select %p732, %s34, 15
        %s734 = smul.addr %s733, 8
        %s735 = scalar_lea.vmem %s19, %s734
        %p736 = scmp.lt.s32.totalorder %s34, 15
        %s737 = scalar_select %p736, %s34, 15
        %s738 = smul.addr %s737, 8
        %s739 = scalar_lea.vmem %s20, %s738
        %p740 = scmp.eq.s32.totalorder %s34, 0
        // Predicated region
        $region89: #{decoder_rollout.1} parent=79 // pred_check
          %p741 = pneg %p740
        $region90: #{decoder_rollout.1} parent=79 // pred_check_branch
          %743 = sbr.rel (%p741) target = $region92
        $region91: #{decoder_rollout.1} parent=79 // pred_region
          %v744 = vld [vmem:[%s3] sm:$0xff]
          %vm745 = vcmask 261120
          %746 = vst.msk [vmem:[#allocation2] sm:$0xff] %vm745, %v744
          %v747 = vld [vmem:[%s4] sm:$0xff]
          %vm748 = vcmask 130048
          %749 = vst.msk [vmem:[#allocation3] sm:$0xff] %vm748, %v747
          %v750 = vld [vmem:[%s5] sm:$0xff]
          %751 = vst.msk [vmem:[#allocation4] sm:$0xff] %vm748, %v750
        $region92: #{decoder_rollout.1} parent=79 // pred_fallthru
          _
        %v752 = vld [vmem:[%s707] sm:$0xff]
        %v753 = vld [vmem:[%s711] sm:$0xff]
        %v754 = vld [vmem:[%s715] sm:$0xff]
        %v755 = vld [vmem:[#allocation2] sm:$0xff]
        %v756 = vld [vmem:[#allocation3] sm:$0xff]
        %v757 = vld [vmem:[#allocation4] sm:$0xff]
        %759 = vrot.lane.b32.xlu0 %v757, 16
        %v760 = vpop.permute.xlu0 %759
        %763 = vrot.lane.b32.xlu0 %v756, 32
        %v764 = vpop.permute.xlu0 %763
        %vm766 = vcmask 130048
        %v767 = vsel %vm766, %v752, %v760
        %vm768 = vcmask 261120
        %v769 = vsel %vm768, %v767, %v764
        %v770 = vld [vmem:[%s6] sm:$0xff]
        %v771 = vld [vmem:[%s6 + $0x8] sm:$0xff]
        %v772 = vld [vmem:[%s6 + $0x10] sm:$0xff]
        %v773 = vld [vmem:[%s6 + $0x18] sm:$0xff]
        %v774 = vld [vmem:[%s6 + $0x20] sm:$0xff]
        %v775 = vld [vmem:[%s6 + $0x28] sm:$0xff]
        %v776 = vld [vmem:[%s6 + $0x30] sm:$0xff]
        %v777 = vld [vmem:[%s6 + $0x38] sm:$0xff]
        %v778 = vld [vmem:[%s6 + $0x40] sm:$0xff]
        %v779 = vld [vmem:[%s6 + $0x48] sm:$0xff]
        %v780 = vld [vmem:[%s6 + $0x50] sm:$0xff]
        %v781 = vld [vmem:[%s6 + $0x58] sm:$0xff]
        %v782 = vld [vmem:[%s6 + $0x60] sm:$0xff]
        %v783 = vld [vmem:[%s6 + $0x68] sm:$0xff]
        %v784 = vld [vmem:[%s6 + $0x70] sm:$0xff]
        %v785 = vld [vmem:[%s6 + $0x78] sm:$0xff]
        %v786 = vld [vmem:[%s6 + $0x80] sm:$0xff]
        %v787 = vld [vmem:[%s6 + $0x88] sm:$0xff]
        %v788 = vld [vmem:[%s7] sm:$0x7]
        %v790 = vlaneseq
        %v791 = vshrl.u32 %v790, 7
        %v792 = vsub.s32 0, %v791
        %v793 = vrot.slane %v788, %v792
        %v794 = vlaneseq
        %v795 = vshrl.u32 %v794, 7
        %v796 = vsub.s32 1, %v795
        %v797 = vrot.slane %v788, %v796
        %v798 = vlaneseq
        %v799 = vshrl.u32 %v798, 7
        %v800 = vsub.s32 2, %v799
        %v801 = vrot.slane %v788, %v800
        %vm805 = vcmask 392192
        %v807 = vsel %vm805, %v769, 0
        %809 = vmatprep.subr.mxu0 %v771
        %810 = vmatpush1.msra.mxu0 %v770
        %811 = vmatprep.subr.mxu0 %v774
        %812 = vmatpush1.msra.mxu0 %v773
        %813 = vmatprep.subr.mxu0 %v777
        %814 = vmatpush1.msra.mxu0 %v776
        %815 = vmatprep.subr.mxu0 %v780
        %816 = vmatpush1.msra.mxu0 %v779
        %817 = vmatprep.subr.mxu0 %v783
        %818 = vmatpush1.msra.mxu0 %v782
        %819 = vmatprep.subr.mxu0 %v786
        %820 = vmatpush1.msra.mxu0 %v785
        %821 = vmatprep.subr.mxu0 0.0
        %822 = vmatpush1.msra.mxu0 0.0
        %823 = vmatprep.subr.mxu0 0.0
        %824 = vmatpush1.msra.mxu0 0.0
        %825 = vmatprep.subr.mxu0 0.0
        %826 = vmatpush1.msra.mxu0 0.0
        %827 = vmatprep.subr.mxu0 0.0
        %828 = vmatpush1.msra.mxu0 0.0
        %829 = vmatprep.subr.mxu0 0.0
        %830 = vmatpush1.msra.mxu0 0.0
        %831 = vmatprep.subr.mxu0 0.0
        %832 = vmatpush1.msra.mxu0 0.0
        %833 = vmatprep.subr.mxu0 0.0
        %834 = vmatpush1.msra.mxu0 0.0
        %835 = vmatprep.subr.mxu0 0.0
        %836 = vmatpush1.msra.mxu0 0.0
        %837 = vmatprep.subr.mxu0 0.0
        %838 = vmatpush1.msra.mxu0 0.0
        %839 = vmatprep.subr.mxu0 0.0
        %840 = vmatpush1.msra.mxu0 0.0
        %841 = vmatprep.subr.mxu0 0.0
        %842 = vmatpush1.msra.mxu0 0.0
        %843 = vmatprep.subr.mxu0 0.0
        %844 = vmatpush1.msra.mxu0 0.0
        %845 = vmatprep.subr.mxu0 0.0
        %846 = vmatpush1.msra.mxu0 0.0
        %847 = vmatprep.subr.mxu0 0.0
        %848 = vmatpush1.msra.mxu0 0.0
        %849 = vmatprep.subr.mxu0 0.0
        %850 = vmatpush1.msra.mxu0 0.0
        %851 = vmatprep.subr.mxu0 0.0
        %852 = vmatpush1.msra.mxu0 0.0
        %853 = vmatprep.subr.mxu0 0.0
        %854 = vmatpush1.msra.mxu0 0.0
        %855 = vmatprep.subr.mxu0 0.0
        %856 = vmatpush1.msra.mxu0 0.0
        %857 = vmatprep.subr.mxu0 0.0
        %858 = vmatpush1.msra.mxu0 0.0
        %859 = vmatprep.subr.mxu0 0.0
        %860 = vmatpush1.msra.mxu0 0.0
        %861 = vmatprep.subr.mxu0 0.0
        %862 = vmatpush1.msra.mxu0 0.0
        %863 = vmatprep.subr.mxu0 0.0
        %864 = vmatpush1.msra.mxu0 0.0
        %865 = vmatprep.subr.mxu0 0.0
        %866 = vmatpush1.msra.mxu0 0.0
        %867 = vmatprep.subr.mxu0 0.0
        %868 = vmatpush1.msra.mxu0 0.0
        %869 = vmatprep.subr.mxu0 0.0
        %870 = vmatpush1.msra.mxu0 0.0
        %871 = vmatprep.subr.mxu0 0.0
        %872 = vmatpush1.msra.mxu0 0.0
        %873 = vmatprep.mubr.f32.mxu0 0.0
        %874 = vmatmul.mubr.f32.gmra.mrb[0].mxu0 %v807
        %v875 = vpop.f32.mrb[0].mxu0
        %v876 = vadd.f32 %v793, %v875
        %v877 = vpop.f32.mrb[0].mxu0
        %v878 = vadd.f32 %v797, %v877
        %879 = vdwg.mxu0
        %880 = vmatprep.subr.mxu0 0.0
        %881 = vmatpush1.msra.mxu0 %v772
        %882 = vmatprep.subr.mxu0 0.0
        %883 = vmatpush1.msra.mxu0 %v775
        %884 = vmatprep.subr.mxu0 0.0
        %885 = vmatpush1.msra.mxu0 %v778
        %886 = vmatprep.subr.mxu0 0.0
        %887 = vmatpush1.msra.mxu0 %v781
        %888 = vmatprep.subr.mxu0 0.0
        %889 = vmatpush1.msra.mxu0 %v784
        %890 = vmatprep.subr.mxu0 0.0
        %891 = vmatpush1.msra.mxu0 %v787
        %892 = vmatprep.subr.mxu0 0.0
        %893 = vmatpush1.msra.mxu0 0.0
        %894 = vmatprep.subr.mxu0 0.0
        %895 = vmatpush1.msra.mxu0 0.0
        %896 = vmatprep.subr.mxu0 0.0
        %897 = vmatpush1.msra.mxu0 0.0
        %898 = vmatprep.subr.mxu0 0.0
        %899 = vmatpush1.msra.mxu0 0.0
        %900 = vmatprep.subr.mxu0 0.0
        %901 = vmatpush1.msra.mxu0 0.0
        %902 = vmatprep.subr.mxu0 0.0
        %903 = vmatpush1.msra.mxu0 0.0
        %904 = vmatprep.subr.mxu0 0.0
        %905 = vmatpush1.msra.mxu0 0.0
        %906 = vmatprep.subr.mxu0 0.0
        %907 = vmatpush1.msra.mxu0 0.0
        %908 = vmatprep.subr.mxu0 0.0
        %909 = vmatpush1.msra.mxu0 0.0
        %910 = vmatprep.subr.mxu0 0.0
        %911 = vmatpush1.msra.mxu0 0.0
        %912 = vmatprep.subr.mxu0 0.0
        %913 = vmatpush1.msra.mxu0 0.0
        %914 = vmatprep.subr.mxu0 0.0
        %915 = vmatpush1.msra.mxu0 0.0
        %916 = vmatprep.subr.mxu0 0.0
        %917 = vmatpush1.msra.mxu0 0.0
        %918 = vmatprep.subr.mxu0 0.0
        %919 = vmatpush1.msra.mxu0 0.0
        %920 = vmatprep.subr.mxu0 0.0
        %921 = vmatpush1.msra.mxu0 0.0
        %922 = vmatprep.subr.mxu0 0.0
        %923 = vmatpush1.msra.mxu0 0.0
        %924 = vmatprep.subr.mxu0 0.0
        %925 = vmatpush1.msra.mxu0 0.0
        %926 = vmatprep.subr.mxu0 0.0
        %927 = vmatpush1.msra.mxu0 0.0
        %928 = vmatprep.subr.mxu0 0.0
        %929 = vmatpush1.msra.mxu0 0.0
        %930 = vmatprep.subr.mxu0 0.0
        %931 = vmatpush1.msra.mxu0 0.0
        %932 = vmatprep.subr.mxu0 0.0
        %933 = vmatpush1.msra.mxu0 0.0
        %934 = vmatprep.subr.mxu0 0.0
        %935 = vmatpush1.msra.mxu0 0.0
        %936 = vmatprep.subr.mxu0 0.0
        %937 = vmatpush1.msra.mxu0 0.0
        %938 = vmatprep.subr.mxu0 0.0
        %939 = vmatpush1.msra.mxu0 0.0
        %940 = vmatprep.subr.mxu0 0.0
        %941 = vmatpush1.msra.mxu0 0.0
        %942 = vmatprep.subr.mxu0 0.0
        %943 = vmatpush1.msra.mxu0 0.0
        %944 = vmatprep.mubr.f32.mxu0 0.0
        %945 = vmatmul.mubr.f32.gmra.mrb[0].mxu0 %v807
        %v946 = vpop.f32.mrb[0].mxu0
        %v947 = vadd.f32 %v801, %v946
        %v948 = vpop.f32.mrb[0].mxu0
        %949 = vdwg.mxu0
        %v950 = vxor.u32 %v876, 2147483648
        %v951 = vmul.f32 %v950, 1.442695
        %v952 = vpow.pop %v951
        %v953 = vadd.f32 %v952, 1.0
        %v954 = vrcp.pop %v953
        %v955 = vmul.f32 1.0, %v954
        %v956 = vxor.u32 %v878, 2147483648
        %v957 = vmul.f32 %v956, 1.442695
        %v958 = vpow.pop %v957
        %v959 = vadd.f32 %v958, 1.0
        %v960 = vrcp.pop %v959
        %v961 = vmul.f32 1.0, %v960
        %v962 = vmul.f32 %v961, %v756
        %v963 = vld [vmem:[%s8] sm:$0xff]
        %v964 = vld [vmem:[%s8 + $0x8] sm:$0xff]
        %v966 = vsel %vm766, %v962, 0
        %968 = vmatprep.subr.mxu0 0.0
        %969 = vmatpush1.msra.mxu0 %v963
        %970 = vmatprep.subr.mxu0 0.0
        %971 = vmatpush1.msra.mxu0 %v964
        %972 = vmatprep.subr.mxu0 0.0
        %973 = vmatpush1.msra.mxu0 0.0
        %974 = vmatprep.subr.mxu0 0.0
        %975 = vmatpush1.msra.mxu0 0.0
        %976 = vmatprep.subr.mxu0 0.0
        %977 = vmatpush1.msra.mxu0 0.0
        %978 = vmatprep.subr.mxu0 0.0
        %979 = vmatpush1.msra.mxu0 0.0
        %980 = vmatprep.subr.mxu0 0.0
        %981 = vmatpush1.msra.mxu0 0.0
        %982 = vmatprep.subr.mxu0 0.0
        %983 = vmatpush1.msra.mxu0 0.0
        %984 = vmatprep.subr.mxu0 0.0
        %985 = vmatpush1.msra.mxu0 0.0
        %986 = vmatprep.subr.mxu0 0.0
        %987 = vmatpush1.msra.mxu0 0.0
        %988 = vmatprep.subr.mxu0 0.0
        %989 = vmatpush1.msra.mxu0 0.0
        %990 = vmatprep.subr.mxu0 0.0
        %991 = vmatpush1.msra.mxu0 0.0
        %992 = vmatprep.subr.mxu0 0.0
        %993 = vmatpush1.msra.mxu0 0.0
        %994 = vmatprep.subr.mxu0 0.0
        %995 = vmatpush1.msra.mxu0 0.0
        %996 = vmatprep.subr.mxu0 0.0
        %997 = vmatpush1.msra.mxu0 0.0
        %998 = vmatprep.subr.mxu0 0.0
        %999 = vmatpush1.msra.mxu0 0.0
        %1000 = vmatprep.subr.mxu0 0.0
        %1001 = vmatpush1.msra.mxu0 0.0
        %1002 = vmatprep.subr.mxu0 0.0
        %1003 = vmatpush1.msra.mxu0 0.0
        %1004 = vmatprep.subr.mxu0 0.0
        %1005 = vmatpush1.msra.mxu0 0.0
        %1006 = vmatprep.subr.mxu0 0.0
        %1007 = vmatpush1.msra.mxu0 0.0
        %1008 = vmatprep.subr.mxu0 0.0
        %1009 = vmatpush1.msra.mxu0 0.0
        %1010 = vmatprep.subr.mxu0 0.0
        %1011 = vmatpush1.msra.mxu0 0.0
        %1012 = vmatprep.subr.mxu0 0.0
        %1013 = vmatpush1.msra.mxu0 0.0
        %1014 = vmatprep.subr.mxu0 0.0
        %1015 = vmatpush1.msra.mxu0 0.0
        %1016 = vmatprep.subr.mxu0 0.0
        %1017 = vmatpush1.msra.mxu0 0.0
        %1018 = vmatprep.subr.mxu0 0.0
        %1019 = vmatpush1.msra.mxu0 0.0
        %1020 = vmatprep.subr.mxu0 0.0
        %1021 = vmatpush1.msra.mxu0 0.0
        %1022 = vmatprep.subr.mxu0 0.0
        %1023 = vmatpush1.msra.mxu0 0.0
        %1024 = vmatprep.subr.mxu0 0.0
        %1025 = vmatpush1.msra.mxu0 0.0
        %1026 = vmatprep.subr.mxu0 0.0
        %1027 = vmatpush1.msra.mxu0 0.0
        %1028 = vmatprep.subr.mxu0 0.0
        %1029 = vmatpush1.msra.mxu0 0.0
        %1030 = vmatprep.subr.mxu0 0.0
        %1031 = vmatpush1.msra.mxu0 0.0
        %1032 = vmatprep.mubr.f32.mxu0 0.0
        %1033 = vmatmul.mubr.f32.gmra.mrb[0].mxu0 %v966
        %v1034 = vpop.f32.mrb[0].mxu0
        %v1035 = vadd.f32 0.0, %v1034
        %v1036 = vpop.f32.mrb[0].mxu0
        %1037 = vdwg.mxu0
        %v1038 = vadd.f32 %v947, %v1035
        %v1039 = vtanh.pop %v1038
        %v1040 = vmul.f32 %v955, %v756
        %v1041 = vsub.f32 1.0, %v955
        %v1042 = vmul.f32 %v1041, %v1039
        %v1043 = vadd.f32 %v1040, %v1042
        %v1044 = vmax.f32 %v1043, -5.0
        %v1045 = vmin.f32 %v1044, 5.0
        %v1046 = vld [vmem:[#allocation5] sm:$0xff]
        %v1047 = vld [vmem:[#allocation5 + $0x8] sm:$0xff]
        %v1048 = vld [vmem:[#allocation5 + $0x10] sm:$0xff]
        %v1049 = vld [vmem:[#allocation5 + $0x18] sm:$0xff]
        %v1050 = vld [vmem:[%s10] sm:$0x3]
        %v1052 = vlaneseq
        %v1053 = vshrl.u32 %v1052, 7
        %v1054 = vsub.s32 0, %v1053
        %v1055 = vrot.slane %v1050, %v1054
        %v1056 = vlaneseq
        %v1057 = vshrl.u32 %v1056, 7
        %v1058 = vsub.s32 1, %v1057
        %v1059 = vrot.slane %v1050, %v1058
        %v1063 = vsel %vm766, %v1045, 0
        %1065 = vmatprep.subr.mxu0 %v1047
        %1066 = vmatpush1.msra.mxu0 %v1046
        %1067 = vmatprep.subr.mxu0 %v1049
        %1068 = vmatpush1.msra.mxu0 %v1048
        %1069 = vmatprep.subr.mxu0 0.0
        %1070 = vmatpush1.msra.mxu0 0.0
        %1071 = vmatprep.subr.mxu0 0.0
        %1072 = vmatpush1.msra.mxu0 0.0
        %1073 = vmatprep.subr.mxu0 0.0
        %1074 = vmatpush1.msra.mxu0 0.0
        %1075 = vmatprep.subr.mxu0 0.0
        %1076 = vmatpush1.msra.mxu0 0.0
        %1077 = vmatprep.subr.mxu0 0.0
        %1078 = vmatpush1.msra.mxu0 0.0
        %1079 = vmatprep.subr.mxu0 0.0
        %1080 = vmatpush1.msra.mxu0 0.0
        %1081 = vmatprep.subr.mxu0 0.0
        %1082 = vmatpush1.msra.mxu0 0.0
        %1083 = vmatprep.subr.mxu0 0.0
        %1084 = vmatpush1.msra.mxu0 0.0
        %1085 = vmatprep.subr.mxu0 0.0
        %1086 = vmatpush1.msra.mxu0 0.0
        %1087 = vmatprep.subr.mxu0 0.0
        %1088 = vmatpush1.msra.mxu0 0.0
        %1089 = vmatprep.subr.mxu0 0.0
        %1090 = vmatpush1.msra.mxu0 0.0
        %1091 = vmatprep.subr.mxu0 0.0
        %1092 = vmatpush1.msra.mxu0 0.0
        %1093 = vmatprep.subr.mxu0 0.0
        %1094 = vmatpush1.msra.mxu0 0.0
        %1095 = vmatprep.subr.mxu0 0.0
        %1096 = vmatpush1.msra.mxu0 0.0
        %1097 = vmatprep.subr.mxu0 0.0
        %1098 = vmatpush1.msra.mxu0 0.0
        %1099 = vmatprep.subr.mxu0 0.0
        %1100 = vmatpush1.msra.mxu0 0.0
        %1101 = vmatprep.subr.mxu0 0.0
        %1102 = vmatpush1.msra.mxu0 0.0
        %1103 = vmatprep.subr.mxu0 0.0
        %1104 = vmatpush1.msra.mxu0 0.0
        %1105 = vmatprep.subr.mxu0 0.0
        %1106 = vmatpush1.msra.mxu0 0.0
        %1107 = vmatprep.subr.mxu0 0.0
        %1108 = vmatpush1.msra.mxu0 0.0
        %1109 = vmatprep.subr.mxu0 0.0
        %1110 = vmatpush1.msra.mxu0 0.0
        %1111 = vmatprep.subr.mxu0 0.0
        %1112 = vmatpush1.msra.mxu0 0.0
        %1113 = vmatprep.subr.mxu0 0.0
        %1114 = vmatpush1.msra.mxu0 0.0
        %1115 = vmatprep.subr.mxu0 0.0
        %1116 = vmatpush1.msra.mxu0 0.0
        %1117 = vmatprep.subr.mxu0 0.0
        %1118 = vmatpush1.msra.mxu0 0.0
        %1119 = vmatprep.subr.mxu0 0.0
        %1120 = vmatpush1.msra.mxu0 0.0
        %1121 = vmatprep.subr.mxu0 0.0
        %1122 = vmatpush1.msra.mxu0 0.0
        %1123 = vmatprep.subr.mxu0 0.0
        %1124 = vmatpush1.msra.mxu0 0.0
        %1125 = vmatprep.subr.mxu0 0.0
        %1126 = vmatpush1.msra.mxu0 0.0
        %1127 = vmatprep.subr.mxu0 0.0
        %1128 = vmatpush1.msra.mxu0 0.0
        %1129 = vmatprep.mubr.f32.mxu0 0.0
        %1130 = vmatmul.mubr.f32.gmra.mrb[0].mxu0 %v1063
        %v1131 = vpop.f32.mrb[0].mxu0
        %v1132 = vadd.f32 %v1055, %v1131
        %v1133 = vpop.f32.mrb[0].mxu0
        %v1134 = vadd.f32 %v1059, %v1133
        %1135 = vdwg.mxu0
        %v1136 = vmul.f32 %v1134, 0.5
        %v1137 = vmul.f32 %v1136, 1.442695
        %v1138 = vpow.pop %v1137
        %v1139 = vmul.f32 %v1138, %v754
        %v1140 = vadd.f32 %v1132, %v1139
        %1142 = vrot.lane.b32.xlu0 %v753, 8
        %v1143 = vpop.permute.xlu0 %1142
        %vm1145 = vcmask 64512
        %v1146 = vsel %vm1145, %v1140, %v1143
        %1148 = vrot.lane.b32.xlu0 %v755, 12
        %v1149 = vpop.permute.xlu0 %1148
        %vm1151 = vcmask 97280
        %v1152 = vsel %vm1151, %v1146, %v1149
        %v1153 = vld [vmem:[%s11] sm:$0xff]
        %v1154 = vld [vmem:[%s11 + $0x8] sm:$0xff]
        %v1155 = vld [vmem:[%s11 + $0x10] sm:$0xff]
        %v1156 = vld [vmem:[%s11 + $0x18] sm:$0xff]
        %v1157 = vld [vmem:[%s11 + $0x20] sm:$0xff]
        %v1158 = vld [vmem:[%s11 + $0x28] sm:$0xff]
        %v1159 = vld [vmem:[%s11 + $0x30] sm:$0xff]
        %v1160 = vld [vmem:[%s11 + $0x38] sm:$0xff]
        %v1161 = vld [vmem:[%s11 + $0x40] sm:$0xff]
        %v1162 = vld [vmem:[%s11 + $0x48] sm:$0xff]
        %v1163 = vld [vmem:[%s11 + $0x50] sm:$0xff]
        %v1164 = vld [vmem:[%s11 + $0x58] sm:$0xff]
        %v1165 = vld [vmem:[%s11 + $0x60] sm:$0xff]
        %v1166 = vld [vmem:[%s11 + $0x68] sm:$0xff]
        %v1167 = vld [vmem:[%s11 + $0x70] sm:$0xff]
        %v1168 = vld [vmem:[%s11 + $0x78] sm:$0xf]
        %v1169 = vld [vmem:[%s11 + $0x80] sm:$0xf]
        %v1170 = vld [vmem:[%s11 + $0x88] sm:$0xf]
        %v1171 = vld [vmem:[%s12] sm:$0x7]
        %v1173 = vlaneseq
        %v1174 = vshrl.u32 %v1173, 7
        %v1175 = vsub.s32 0, %v1174
        %v1176 = vrot.slane %v1171, %v1175
        %v1177 = vlaneseq
        %v1178 = vshrl.u32 %v1177, 7
        %v1179 = vsub.s32 1, %v1178
        %v1180 = vrot.slane %v1171, %v1179
        %v1181 = vlaneseq
        %v1182 = vshrl.u32 %v1181, 7
        %v1183 = vsub.s32 2, %v1182
        %v1184 = vrot.slane %v1171, %v1183
        %vm1188 = vcmask 359424
        %v1190 = vsel %vm1188, %v1152, 0
        %vm1192 = vcmask 1043456
        %v1194 = vsel %vm1192, %v1168, 0
        %v1197 = vsel %vm1192, %v1169, 0
        %v1200 = vsel %vm1192, %v1170, 0
        %1202 = vmatprep.subr.mxu0 %v1154
        %1203 = vmatpush1.msra.mxu0 %v1153
        %1204 = vmatprep.subr.mxu0 %v1157
        %1205 = vmatpush1.msra.mxu0 %v1156
        %1206 = vmatprep.subr.mxu0 %v1160
        %1207 = vmatpush1.msra.mxu0 %v1159
        %1208 = vmatprep.subr.mxu0 %v1163
        %1209 = vmatpush1.msra.mxu0 %v1162
        %1210 = vmatprep.subr.mxu0 %v1166
        %1211 = vmatpush1.msra.mxu0 %v1165
        %1212 = vmatprep.subr.mxu0 %v1197
        %1213 = vmatpush1.msra.mxu0 %v1194
        %1214 = vmatprep.subr.mxu0 0.0
        %1215 = vmatpush1.msra.mxu0 0.0
        %1216 = vmatprep.subr.mxu0 0.0
        %1217 = vmatpush1.msra.mxu0 0.0
        %1218 = vmatprep.subr.mxu0 0.0
        %1219 = vmatpush1.msra.mxu0 0.0
        %1220 = vmatprep.subr.mxu0 0.0
        %1221 = vmatpush1.msra.mxu0 0.0
        %1222 = vmatprep.subr.mxu0 0.0
        %1223 = vmatpush1.msra.mxu0 0.0
        %1224 = vmatprep.subr.mxu0 0.0
        %1225 = vmatpush1.msra.mxu0 0.0
        %1226 = vmatprep.subr.mxu0 0.0
        %1227 = vmatpush1.msra.mxu0 0.0
        %1228 = vmatprep.subr.mxu0 0.0
        %1229 = vmatpush1.msra.mxu0 0.0
        %1230 = vmatprep.subr.mxu0 0.0
        %1231 = vmatpush1.msra.mxu0 0.0
        %1232 = vmatprep.subr.mxu0 0.0
        %1233 = vmatpush1.msra.mxu0 0.0
        %1234 = vmatprep.subr.mxu0 0.0
        %1235 = vmatpush1.msra.mxu0 0.0
        %1236 = vmatprep.subr.mxu0 0.0
        %1237 = vmatpush1.msra.mxu0 0.0
        %1238 = vmatprep.subr.mxu0 0.0
        %1239 = vmatpush1.msra.mxu0 0.0
        %1240 = vmatprep.subr.mxu0 0.0
        %1241 = vmatpush1.msra.mxu0 0.0
        %1242 = vmatprep.subr.mxu0 0.0
        %1243 = vmatpush1.msra.mxu0 0.0
        %1244 = vmatprep.subr.mxu0 0.0
        %1245 = vmatpush1.msra.mxu0 0.0
        %1246 = vmatprep.subr.mxu0 0.0
        %1247 = vmatpush1.msra.mxu0 0.0
        %1248 = vmatprep.subr.mxu0 0.0
        %1249 = vmatpush1.msra.mxu0 0.0
        %1250 = vmatprep.subr.mxu0 0.0
        %1251 = vmatpush1.msra.mxu0 0.0
        %1252 = vmatprep.subr.mxu0 0.0
        %1253 = vmatpush1.msra.mxu0 0.0
        %1254 = vmatprep.subr.mxu0 0.0
        %1255 = vmatpush1.msra.mxu0 0.0
        %1256 = vmatprep.subr.mxu0 0.0
        %1257 = vmatpush1.msra.mxu0 0.0
        %1258 = vmatprep.subr.mxu0 0.0
        %1259 = vmatpush1.msra.mxu0 0.0
        %1260 = vmatprep.subr.mxu0 0.0
        %1261 = vmatpush1.msra.mxu0 0.0
        %1262 = vmatprep.subr.mxu0 0.0
        %1263 = vmatpush1.msra.mxu0 0.0
        %1264 = vmatprep.subr.mxu0 0.0
        %1265 = vmatpush1.msra.mxu0 0.0
        %1266 = vmatprep.mubr.f32.mxu0 0.0
        %1267 = vmatmul.mubr.f32.gmra.mrb[0].mxu0 %v1190
        %v1268 = vpop.f32.mrb[0].mxu0
        %v1269 = vadd.f32 %v1176, %v1268
        %v1270 = vpop.f32.mrb[0].mxu0
        %v1271 = vadd.f32 %v1180, %v1270
        %1272 = vdwg.mxu0
        %1273 = vmatprep.subr.mxu0 0.0
        %1274 = vmatpush1.msra.mxu0 %v1155
        %1275 = vmatprep.subr.mxu0 0.0
        %1276 = vmatpush1.msra.mxu0 %v1158
        %1277 = vmatprep.subr.mxu0 0.0
        %1278 = vmatpush1.msra.mxu0 %v1161
        %1279 = vmatprep.subr.mxu0 0.0
        %1280 = vmatpush1.msra.mxu0 %v1164
        %1281 = vmatprep.subr.mxu0 0.0
        %1282 = vmatpush1.msra.mxu0 %v1167
        %1283 = vmatprep.subr.mxu0 0.0
        %1284 = vmatpush1.msra.mxu0 %v1200
        %1285 = vmatprep.subr.mxu0 0.0
        %1286 = vmatpush1.msra.mxu0 0.0
        %1287 = vmatprep.subr.mxu0 0.0
        %1288 = vmatpush1.msra.mxu0 0.0
        %1289 = vmatprep.subr.mxu0 0.0
        %1290 = vmatpush1.msra.mxu0 0.0
        %1291 = vmatprep.subr.mxu0 0.0
        %1292 = vmatpush1.msra.mxu0 0.0
        %1293 = vmatprep.subr.mxu0 0.0
        %1294 = vmatpush1.msra.mxu0 0.0
        %1295 = vmatprep.subr.mxu0 0.0
        %1296 = vmatpush1.msra.mxu0 0.0
        %1297 = vmatprep.subr.mxu0 0.0
        %1298 = vmatpush1.msra.mxu0 0.0
        %1299 = vmatprep.subr.mxu0 0.0
        %1300 = vmatpush1.msra.mxu0 0.0
        %1301 = vmatprep.subr.mxu0 0.0
        %1302 = vmatpush1.msra.mxu0 0.0
        %1303 = vmatprep.subr.mxu0 0.0
        %1304 = vmatpush1.msra.mxu0 0.0
        %1305 = vmatprep.subr.mxu0 0.0
        %1306 = vmatpush1.msra.mxu0 0.0
        %1307 = vmatprep.subr.mxu0 0.0
        %1308 = vmatpush1.msra.mxu0 0.0
        %1309 = vmatprep.subr.mxu0 0.0
        %1310 = vmatpush1.msra.mxu0 0.0
        %1311 = vmatprep.subr.mxu0 0.0
        %1312 = vmatpush1.msra.mxu0 0.0
        %1313 = vmatprep.subr.mxu0 0.0
        %1314 = vmatpush1.msra.mxu0 0.0
        %1315 = vmatprep.subr.mxu0 0.0
        %1316 = vmatpush1.msra.mxu0 0.0
        %1317 = vmatprep.subr.mxu0 0.0
        %1318 = vmatpush1.msra.mxu0 0.0
        %1319 = vmatprep.subr.mxu0 0.0
        %1320 = vmatpush1.msra.mxu0 0.0
        %1321 = vmatprep.subr.mxu0 0.0
        %1322 = vmatpush1.msra.mxu0 0.0
        %1323 = vmatprep.subr.mxu0 0.0
        %1324 = vmatpush1.msra.mxu0 0.0
        %1325 = vmatprep.subr.mxu0 0.0
        %1326 = vmatpush1.msra.mxu0 0.0
        %1327 = vmatprep.subr.mxu0 0.0
        %1328 = vmatpush1.msra.mxu0 0.0
        %1329 = vmatprep.subr.mxu0 0.0
        %1330 = vmatpush1.msra.mxu0 0.0
        %1331 = vmatprep.subr.mxu0 0.0
        %1332 = vmatpush1.msra.mxu0 0.0
        %1333 = vmatprep.subr.mxu0 0.0
        %1334 = vmatpush1.msra.mxu0 0.0
        %1335 = vmatprep.subr.mxu0 0.0
        %1336 = vmatpush1.msra.mxu0 0.0
        %1337 = vmatprep.mubr.f32.mxu0 0.0
        %1338 = vmatmul.mubr.f32.gmra.mrb[0].mxu0 %v1190
        %v1339 = vpop.f32.mrb[0].mxu0
        %v1340 = vadd.f32 %v1184, %v1339
        %v1341 = vpop.f32.mrb[0].mxu0
        %1342 = vdwg.mxu0
        %v1343 = vxor.u32 %v1269, 2147483648
        %v1344 = vmul.f32 %v1343, 1.442695
        %v1345 = vpow.pop %v1344
        %v1346 = vadd.f32 %v1345, 1.0
        %v1347 = vrcp.pop %v1346
        %v1348 = vmul.f32 1.0, %v1347
        %v1349 = vxor.u32 %v1271, 2147483648
        %v1350 = vmul.f32 %v1349, 1.442695
        %v1351 = vpow.pop %v1350
        %v1352 = vadd.f32 %v1351, 1.0
        %v1353 = vrcp.pop %v1352
        %v1354 = vmul.f32 1.0, %v1353
        %v1355 = vmul.f32 %v1354, %v755
        %v1356 = vld [vmem:[#allocation7] sm:$0xff]
        %v1357 = vld [vmem:[#allocation7 + $0x8] sm:$0xff]
        %v1358 = vld [vmem:[#allocation7 + $0x10] sm:$0xff]
        %v1359 = vld [vmem:[#allocation7 + $0x18] sm:$0xff]
        %v1361 = vsel %vm768, %v1355, 0
        %1363 = vmatprep.subr.mxu0 0.0
        %1364 = vmatpush1.msra.mxu0 %v1356
        %1365 = vmatprep.subr.mxu0 0.0
        %1366 = vmatpush1.msra.mxu0 %v1357
        %1367 = vmatprep.subr.mxu0 0.0
        %1368 = vmatpush1.msra.mxu0 %v1358
        %1369 = vmatprep.subr.mxu0 0.0
        %1370 = vmatpush1.msra.mxu0 %v1359
        %1371 = vmatprep.subr.mxu0 0.0
        %1372 = vmatpush1.msra.mxu0 0.0
        %1373 = vmatprep.subr.mxu0 0.0
        %1374 = vmatpush1.msra.mxu0 0.0
        %1375 = vmatprep.subr.mxu0 0.0
        %1376 = vmatpush1.msra.mxu0 0.0
        %1377 = vmatprep.subr.mxu0 0.0
        %1378 = vmatpush1.msra.mxu0 0.0
        %1379 = vmatprep.subr.mxu0 0.0
        %1380 = vmatpush1.msra.mxu0 0.0
        %1381 = vmatprep.subr.mxu0 0.0
        %1382 = vmatpush1.msra.mxu0 0.0
        %1383 = vmatprep.subr.mxu0 0.0
        %1384 = vmatpush1.msra.mxu0 0.0
        %1385 = vmatprep.subr.mxu0 0.0
        %1386 = vmatpush1.msra.mxu0 0.0
        %1387 = vmatprep.subr.mxu0 0.0
        %1388 = vmatpush1.msra.mxu0 0.0
        %1389 = vmatprep.subr.mxu0 0.0
        %1390 = vmatpush1.msra.mxu0 0.0
        %1391 = vmatprep.subr.mxu0 0.0
        %1392 = vmatpush1.msra.mxu0 0.0
        %1393 = vmatprep.subr.mxu0 0.0
        %1394 = vmatpush1.msra.mxu0 0.0
        %1395 = vmatprep.subr.mxu0 0.0
        %1396 = vmatpush1.msra.mxu0 0.0
        %1397 = vmatprep.subr.mxu0 0.0
        %1398 = vmatpush1.msra.mxu0 0.0
        %1399 = vmatprep.subr.mxu0 0.0
        %1400 = vmatpush1.msra.mxu0 0.0
        %1401 = vmatprep.subr.mxu0 0.0
        %1402 = vmatpush1.msra.mxu0 0.0
        %1403 = vmatprep.subr.mxu0 0.0
        %1404 = vmatpush1.msra.mxu0 0.0
        %1405 = vmatprep.subr.mxu0 0.0
        %1406 = vmatpush1.msra.mxu0 0.0
        %1407 = vmatprep.subr.mxu0 0.0
        %1408 = vmatpush1.msra.mxu0 0.0
        %1409 = vmatprep.subr.mxu0 0.0
        %1410 = vmatpush1.msra.mxu0 0.0
        %1411 = vmatprep.subr.mxu0 0.0
        %1412 = vmatpush1.msra.mxu0 0.0
        %1413 = vmatprep.subr.mxu0 0.0
        %1414 = vmatpush1.msra.mxu0 0.0
        %1415 = vmatprep.subr.mxu0 0.0
        %1416 = vmatpush1.msra.mxu0 0.0
        %1417 = vmatprep.subr.mxu0 0.0
        %1418 = vmatpush1.msra.mxu0 0.0
        %1419 = vmatprep.subr.mxu0 0.0
        %1420 = vmatpush1.msra.mxu0 0.0
        %1421 = vmatprep.subr.mxu0 0.0
        %1422 = vmatpush1.msra.mxu0 0.0
        %1423 = vmatprep.subr.mxu0 0.0
        %1424 = vmatpush1.msra.mxu0 0.0
        %1425 = vmatprep.subr.mxu0 0.0
        %1426 = vmatpush1.msra.mxu0 0.0
        %1427 = vmatprep.mubr.f32.mxu0 0.0
        %1428 = vmatmul.mubr.f32.gmra.mrb[0].mxu0 %v1361
        %v1429 = vpop.f32.mrb[0].mxu0
        %v1430 = vadd.f32 0.0, %v1429
        %v1431 = vpop.f32.mrb[0].mxu0
        %1432 = vdwg.mxu0
        %v1433 = vadd.f32 %v1340, %v1430
        %v1434 = vtanh.pop %v1433
        %v1435 = vmul.f32 %v1348, %v755
        %v1436 = vsub.f32 1.0, %v1348
        %v1437 = vmul.f32 %v1436, %v1434
        %v1438 = vadd.f32 %v1435, %v1437
        %v1439 = vmax.f32 %v1438, -5.0
        %v1440 = vmin.f32 %v1439, 5.0
        %v1441 = vld [vmem:[%s14] sm:$0xff]
        %v1442 = vld [vmem:[%s14 + $0x8] sm:$0xff]
        %v1443 = vld [vmem:[%s14 + $0x10] sm:$0xff]
        %v1444 = vld [vmem:[%s14 + $0x18] sm:$0xff]
        %v1446 = vsel %vm768, %v1440, 0
        %1448 = vmatprep.subr.mxu0 0.0
        %1449 = vmatpush1.msra.mxu0 %v1441
        %1450 = vmatprep.subr.mxu0 0.0
        %1451 = vmatpush1.msra.mxu0 %v1442
        %1452 = vmatprep.subr.mxu0 0.0
        %1453 = vmatpush1.msra.mxu0 %v1443
        %1454 = vmatprep.subr.mxu0 0.0
        %1455 = vmatpush1.msra.mxu0 %v1444
        %1456 = vmatprep.subr.mxu0 0.0
        %1457 = vmatpush1.msra.mxu0 0.0
        %1458 = vmatprep.subr.mxu0 0.0
        %1459 = vmatpush1.msra.mxu0 0.0
        %1460 = vmatprep.subr.mxu0 0.0
        %1461 = vmatpush1.msra.mxu0 0.0
        %1462 = vmatprep.subr.mxu0 0.0
        %1463 = vmatpush1.msra.mxu0 0.0
        %1464 = vmatprep.subr.mxu0 0.0
        %1465 = vmatpush1.msra.mxu0 0.0
        %1466 = vmatprep.subr.mxu0 0.0
        %1467 = vmatpush1.msra.mxu0 0.0
        %1468 = vmatprep.subr.mxu0 0.0
        %1469 = vmatpush1.msra.mxu0 0.0
        %1470 = vmatprep.subr.mxu0 0.0
        %1471 = vmatpush1.msra.mxu0 0.0
        %1472 = vmatprep.subr.mxu0 0.0
        %1473 = vmatpush1.msra.mxu0 0.0
        %1474 = vmatprep.subr.mxu0 0.0
        %1475 = vmatpush1.msra.mxu0 0.0
        %1476 = vmatprep.subr.mxu0 0.0
        %1477 = vmatpush1.msra.mxu0 0.0
        %1478 = vmatprep.subr.mxu0 0.0
        %1479 = vmatpush1.msra.mxu0 0.0
        %1480 = vmatprep.subr.mxu0 0.0
        %1481 = vmatpush1.msra.mxu0 0.0
        %1482 = vmatprep.subr.mxu0 0.0
        %1483 = vmatpush1.msra.mxu0 0.0
        %1484 = vmatprep.subr.mxu0 0.0
        %1485 = vmatpush1.msra.mxu0 0.0
        %1486 = vmatprep.subr.mxu0 0.0
        %1487 = vmatpush1.msra.mxu0 0.0
        %1488 = vmatprep.subr.mxu0 0.0
        %1489 = vmatpush1.msra.mxu0 0.0
        %1490 = vmatprep.subr.mxu0 0.0
        %1491 = vmatpush1.msra.mxu0 0.0
        %1492 = vmatprep.subr.mxu0 0.0
        %1493 = vmatpush1.msra.mxu0 0.0
        %1494 = vmatprep.subr.mxu0 0.0
        %1495 = vmatpush1.msra.mxu0 0.0
        %1496 = vmatprep.subr.mxu0 0.0
        %1497 = vmatpush1.msra.mxu0 0.0
        %1498 = vmatprep.subr.mxu0 0.0
        %1499 = vmatpush1.msra.mxu0 0.0
        %1500 = vmatprep.subr.mxu0 0.0
        %1501 = vmatpush1.msra.mxu0 0.0
        %1502 = vmatprep.subr.mxu0 0.0
        %1503 = vmatpush1.msra.mxu0 0.0
        %1504 = vmatprep.subr.mxu0 0.0
        %1505 = vmatpush1.msra.mxu0 0.0
        %1506 = vmatprep.subr.mxu0 0.0
        %1507 = vmatpush1.msra.mxu0 0.0
        %1508 = vmatprep.subr.mxu0 0.0
        %1509 = vmatpush1.msra.mxu0 0.0
        %1510 = vmatprep.subr.mxu0 0.0
        %1511 = vmatpush1.msra.mxu0 0.0
        %1512 = vmatprep.mubr.f32.mxu0 0.0
        %1513 = vmatmul.mubr.f32.gmra.mrb[0].mxu0 %v1446
        %v1514 = vpop.f32.mrb[0].mxu0
        %v1515 = vadd.f32 0.0, %v1514
        %v1516 = vpop.f32.mrb[0].mxu0
        %1517 = vdwg.mxu0
        %1518 = vst.msk [vmem:[#allocation2] sm:$0xff] %vm768, %v1440
        %1519 = vst.msk [vmem:[#allocation3] sm:$0xff] %vm766, %v1045
        %1520 = vst.msk [vmem:[#allocation4] sm:$0xff] %vm766, %v1515
        %1521 = vst.msk [vmem:[%s719] sm:$0xff] %vm768, %v1440
        %1522 = vst.msk [vmem:[%s723] sm:$0xff] %vm766, %v1045
        %1523 = vst.msk [vmem:[%s727] sm:$0xff] %vm1145, %v1132
        %1524 = vst.msk [vmem:[%s731] sm:$0xff] %vm1145, %v1138
        %1525 = vst.msk [vmem:[%s735] sm:$0xff] %vm1151, %v1146
        %1526 = vst.msk [vmem:[%s739] sm:$0xff] %vm766, %v1515
        %p1527 = scmp.lt.s32.totalorder %s34, 15
        %s1528 = scalar_select %p1527, %s34, 15
        %s1529 = smul.addr %s1528, 8
        %s1530 = scalar_lea.vmem %s15, %s1529
        %p1531 = scmp.lt.s32.totalorder %s34, 15
        %s1532 = scalar_select %p1531, %s34, 15
        %s1533 = smul.addr %s1532, 8
        %s1534 = scalar_lea.vmem %s16, %s1533
        %p1535 = scmp.lt.s32.totalorder %s34, 15
        %s1536 = scalar_select %p1535, %s34, 15
        %s1537 = smul.addr %s1536, 8
        %s1538 = scalar_lea.vmem %s17, %s1537
        %p1539 = scmp.lt.s32.totalorder %s34, 15
        %s1540 = scalar_select %p1539, %s34, 15
        %s1541 = smul.addr %s1540, 8
        %s1542 = scalar_lea.vmem %s18, %s1541
        %p1543 = scmp.lt.s32.totalorder %s34, 15
        %s1544 = scalar_select %p1543, %s34, 15
        %s1545 = smul.addr %s1544, 8
        %s1546 = scalar_lea.vmem %s19, %s1545
        %p1547 = scmp.lt.s32.totalorder %s34, 15
        %s1548 = scalar_select %p1547, %s34, 15
        %s1549 = smul.addr %s1548, 8
        %s1550 = scalar_lea.vmem %s20, %s1549
        // Predicated region
        $region93: #{decoder_rollout.1} parent=79 // pred_check
          %p1551 = pneg %p382
        $region94: #{decoder_rollout.1} parent=79 // pred_check_branch
          %1553 = sbr.rel (%p1551) target = $region96
        $region95: #{decoder_rollout.1} parent=79 // pred_region
          _
        $region96: #{decoder_rollout.1} parent=79 // pred_fallthru
          _
        // Predicated region
        $region97: #{decoder_rollout.1} parent=79 // pred_check
          %p1554 = pneg %p408
        $region98: #{decoder_rollout.1} parent=79 // pred_check_branch
          %1556 = sbr.rel (%p1554) target = $region100
        $region99: #{decoder_rollout.1} parent=79 // pred_region
          _
        $region100: #{decoder_rollout.1} parent=79 // pred_fallthru
          _
        // Predicated region
        $region101: #{decoder_rollout.1} parent=79 // pred_check
          %p1557 = pneg %p434
        $region102: #{decoder_rollout.1} parent=79 // pred_check_branch
          %1559 = sbr.rel (%p1557) target = $region104
        $region103: #{decoder_rollout.1} parent=79 // pred_region
          _
        $region104: #{decoder_rollout.1} parent=79 // pred_fallthru
          _
        // Predicated region
        $region105: #{decoder_rollout.1} parent=79 // pred_check
          %p1560 = pneg %p460
        $region106: #{decoder_rollout.1} parent=79 // pred_check_branch
          %1562 = sbr.rel (%p1560) target = $region108
        $region107: #{decoder_rollout.1} parent=79 // pred_region
          _
        $region108: #{decoder_rollout.1} parent=79 // pred_fallthru
          _
        // Predicated region
        $region109: #{decoder_rollout.1} parent=79 // pred_check
          %p1563 = pneg %p486
        $region110: #{decoder_rollout.1} parent=79 // pred_check_branch
          %1565 = sbr.rel (%p1563) target = $region112
        $region111: #{decoder_rollout.1} parent=79 // pred_region
          _
        $region112: #{decoder_rollout.1} parent=79 // pred_fallthru
          _
        // Predicated region
        $region113: #{decoder_rollout.1} parent=79 // pred_check
          %p1566 = pneg %p512
        $region114: #{decoder_rollout.1} parent=79 // pred_check_branch
          %1568 = sbr.rel (%p1566) target = $region116
        $region115: #{decoder_rollout.1} parent=79 // pred_region
          _
        $region116: #{decoder_rollout.1} parent=79 // pred_fallthru
          _
      $region80: #{decoder_rollout.1} parent=5 // pred_fallthru
        _
      %p1569 = scmp.le.s32.totalorder 2, %s29
      // Predicated region
      $region117: #{decoder_rollout.1} parent=5 // pred_check
        %p1570 = pneg %p1569
      $region118: #{decoder_rollout.1} parent=5 // pred_check_branch
        %1572 = sbr.rel (%p1570) target = $region120
      $region119: #{decoder_rollout.1} parent=5 // pred_region
        %s1573 = ssub.s32 %s29, 2
        // Predicated region
        $region121: #{decoder_rollout.1} parent=119 // pred_check
          %p1574 = pneg %p388
        $region122: #{decoder_rollout.1} parent=119 // pred_check_branch
          %1576 = sbr.rel (%p1574) target = $region124
        $region123: #{decoder_rollout.1} parent=119 // pred_region
          %p1577 = scmp.lt.s32.totalorder %s35, 15
          %s1578 = scalar_select %p1577, %s35, 15
          %s1579 = smul.addr %s1578, 8
          %s1580 = scalar_lea.vmem %s15, %s1579
        $region124: #{decoder_rollout.1} parent=119 // pred_fallthru
          _
        // Predicated region
        $region125: #{decoder_rollout.1} parent=119 // pred_check
          %p1581 = pneg %p414
        $region126: #{decoder_rollout.1} parent=119 // pred_check_branch
          %1583 = sbr.rel (%p1581) target = $region128
        $region127: #{decoder_rollout.1} parent=119 // pred_region
          %p1584 = scmp.lt.s32.totalorder %s35, 15
          %s1585 = scalar_select %p1584, %s35, 15
          %s1586 = smul.addr %s1585, 8
          %s1587 = scalar_lea.vmem %s16, %s1586
        $region128: #{decoder_rollout.1} parent=119 // pred_fallthru
          _
        // Predicated region
        $region129: #{decoder_rollout.1} parent=119 // pred_check
          %p1588 = pneg %p440
        $region130: #{decoder_rollout.1} parent=119 // pred_check_branch
          %1590 = sbr.rel (%p1588) target = $region132
        $region131: #{decoder_rollout.1} parent=119 // pred_region
          %p1591 = scmp.lt.s32.totalorder %s35, 15
          %s1592 = scalar_select %p1591, %s35, 15
          %s1593 = smul.addr %s1592, 8
          %s1594 = scalar_lea.vmem %s17, %s1593
        $region132: #{decoder_rollout.1} parent=119 // pred_fallthru
          _
        // Predicated region
        $region133: #{decoder_rollout.1} parent=119 // pred_check
          %p1595 = pneg %p466
        $region134: #{decoder_rollout.1} parent=119 // pred_check_branch
          %1597 = sbr.rel (%p1595) target = $region136
        $region135: #{decoder_rollout.1} parent=119 // pred_region
          %p1598 = scmp.lt.s32.totalorder %s35, 15
          %s1599 = scalar_select %p1598, %s35, 15
          %s1600 = smul.addr %s1599, 8
          %s1601 = scalar_lea.vmem %s18, %s1600
        $region136: #{decoder_rollout.1} parent=119 // pred_fallthru
          _
        // Predicated region
        $region137: #{decoder_rollout.1} parent=119 // pred_check
          %p1602 = pneg %p492
        $region138: #{decoder_rollout.1} parent=119 // pred_check_branch
          %1604 = sbr.rel (%p1602) target = $region140
        $region139: #{decoder_rollout.1} parent=119 // pred_region
          %p1605 = scmp.lt.s32.totalorder %s35, 15
          %s1606 = scalar_select %p1605, %s35, 15
          %s1607 = smul.addr %s1606, 8
          %s1608 = scalar_lea.vmem %s19, %s1607
        $region140: #{decoder_rollout.1} parent=119 // pred_fallthru
          _
        // Predicated region
        $region141: #{decoder_rollout.1} parent=119 // pred_check
          %p1609 = pneg %p518
        $region142: #{decoder_rollout.1} parent=119 // pred_check_branch
          %1611 = sbr.rel (%p1609) target = $region144
        $region143: #{decoder_rollout.1} parent=119 // pred_region
          %p1612 = scmp.lt.s32.totalorder %s35, 15
          %s1613 = scalar_select %p1612, %s35, 15
          %s1614 = smul.addr %s1613, 8
          %s1615 = scalar_lea.vmem %s20, %s1614
        $region144: #{decoder_rollout.1} parent=119 // pred_fallthru
          _
      $region120: #{decoder_rollout.1} parent=5 // pred_fallthru
        _
    $region6: #{decoder_rollout.1} parent=1 // loop_footer
      %s33 = sadd.s32 1, %s29
    $region7: #{decoder_rollout.1} parent=1 // loop_footer_branch
      %28 = sbr.rel target = $region3
    $region8: #{decoder_rollout.1} parent=1 // loop_exit
      _
    %1616 = vsyncpa [#allocation6], 1
    %s1617 = scalar_lea.sflag [#allocation6], 1
    %1618 = vsyncpa %s1617, 1
    %1619 = vsyncpa [#allocation8], 1

</llo_original>
